<compile_context>
chip_gen: v5e
topology: v5e:2x2
jax: 0.10.0
libtpu: 0.0.40
codegen_flags: <defaults>
</compile_context>

<pallas_src>
import jax
import jax.numpy as jnp
from jax.experimental import pallas as pl
from jax.experimental.pallas import tpu as pltpu


def _round_up(x, m):
    return (x + m - 1) // m * m


def _lp_mlp_kernel(src_ref, dst_ref, w1a_ref, w1b_ref, b1_ref, w3_ref, b3_ref,
                   out_ref):
    """One tile of edges: sigmoid(relu(src@W1a + dst@W1b + b1) . w3 + b3).

    Layer 1: src@W1a + dst@W1b == concat([src, dst]) @ W1 with W1 split row-wise,
    i.e. the edge_cat concat is fused into the kernel (MXU, f32 accumulation).
    Layer 2 (H -> 1): VPU multiply + XLU lane reduce (keeps the MXU slot free).
    Epilogue (bias / ReLU / stable sigmoid) stays in f32.
    """
    h = jnp.dot(src_ref[...], w1a_ref[...], preferred_element_type=jnp.float32)
    h = h + jnp.dot(dst_ref[...], w1b_ref[...], preferred_element_type=jnp.float32)
    h = jnp.maximum(h + b1_ref[...], 0.0)                                    # (TM, H) f32
    logit = jnp.sum(h * w3_ref[...], axis=-1, keepdims=True) + b3_ref[0, 0]  # (TM, 1)
    # Numerically stable two-sided sigmoid (no overflow for very negative logits).
    z = jnp.exp(-jnp.abs(logit))          # in (0, 1]
    inv = 1.0 / (1.0 + z)                 # EUP reciprocal
    out_ref[...] = jnp.where(logit >= 0, inv, z * inv).astype(out_ref.dtype)


def link_prediction_pallas(z_src, z_dst, src_idx, dst_idx, params, *,
                           tile_m=1024, matmul_dtype=jnp.bfloat16):
    """Link_Prediction MLP over gathered edge endpoints.

    z_src, z_dst : (N, D) node feature tables.
    src_idx, dst_idx : (E,) int32 edge endpoint indices into the tables.
    params : (w1_t, b1, w3_t, b3) with shapes (2D, H), (1, H), (H, 1), (1, 1).
    Returns (E, 1) f32 scores.
    """
    w1_t, b1, w3_t, b3 = params
    E = int(src_idx.shape[0])
    D = int(z_src.shape[1])
    H = int(w1_t.shape[1])
    assert w1_t.shape[0] == 2 * D
    assert z_dst.shape[1] == D

    # Tile size: big enough to amortize per-step overhead, multiple of 256,
    # but clamped so tiny edge counts do not pay huge padding.
    tile = max(256, min(int(tile_m), _round_up(max(E, 1), 256)))
    assert tile % 256 == 0
    Ep = _round_up(max(E, 1), tile)

    # Cast the (small) node tables first, pad the index vectors, and let the XLA
    # gather emit the final (Ep, D) matmul-dtype arrays directly: a single HBM pass
    # over the edge features, already in kernel layout (no lane padding in HBM).
    src_feat = z_src.astype(matmul_dtype)[jnp.pad(src_idx, (0, Ep - E))]
    dst_feat = z_dst.astype(matmul_dtype)[jnp.pad(dst_idx, (0, Ep - E))]

    # Split W1 row-wise into the src / dst halves (concat fused into the kernel).
    w1a = w1_t[:D].astype(matmul_dtype)                 # (D, H)
    w1b = w1_t[D:].astype(matmul_dtype)                 # (D, H)
    b1p = b1.astype(jnp.float32)                        # (1, H)
    w3r = w3_t.T.astype(jnp.float32)                    # (1, H)
    b3p = b3.astype(jnp.float32)                        # (1, 1), lives in SMEM

    grid = (Ep // tile,)
    out = pl.pallas_call(
        _lp_mlp_kernel,
        out_shape=jax.ShapeDtypeStruct((Ep, 1), jnp.float32),
        grid_spec=pltpu.PrefetchScalarGridSpec(
            num_scalar_prefetch=0,
            grid=grid,
            in_specs=[
                # Edge tiles: last block dim == full array dim D (no HBM lane pad).
                pl.BlockSpec((tile, D), lambda i: (i, 0)),   # src tile
                pl.BlockSpec((tile, D), lambda i: (i, 0)),   # dst tile
                # Constant weight blocks (full extent, tiny).
                pl.BlockSpec((D, H), lambda i: (0, 0)),      # W1 (src half)
                pl.BlockSpec((D, H), lambda i: (0, 0)),      # W1 (dst half)
                pl.BlockSpec((1, H), lambda i: (0, 0)),      # b1
                pl.BlockSpec((1, H), lambda i: (0, 0)),      # w3 row
                pl.BlockSpec(memory_space=pltpu.MemorySpace.SMEM),  # b3 scalar
            ],
            out_specs=pl.BlockSpec((tile, 1), lambda i: (i, 0)),
        ),
        compiler_params=pltpu.CompilerParams(
            # Edge tiles are independent -> shardable across v7x's two TensorCores.
            dimension_semantics=("parallel",),
        ),
    )(src_feat, dst_feat, w1a, w1b, b1p, w3r, b3p)
    return out[:E]


def graph_lp_forward(params, zi, zj, zn, pos_edges, neg_edges, *, tile_m=1024,
                     matmul_dtype=jnp.bfloat16):
    """GraphLP.forward.

    zi, zj, zn : (N, D) node features.
    pos_edges / neg_edges : (src_ids, dst_ids), each int32 (E,).
    Returns (pos_score, neg_score), each (E_pos, 1).
    """
    pos_src, pos_dst = pos_edges
    del neg_edges, zn  # only needed for the (buggy) reference's unused neg_graph raw.

    pos_score = link_prediction_pallas(zi, zj, pos_src, pos_dst, params,
                                       tile_m=tile_m, matmul_dtype=matmul_dtype)
    # Reference bug preserved: the PyTorch code computes neg_score from
    # pos_graph.edata['raw'], so neg_score is IDENTICAL to pos_score.  We alias it
    # rather than running the kernel twice (XLA does not CSE custom calls).
    neg_score = pos_score
    return pos_score, neg_score


def init_params(key, in_feats, hid_feats, dtype=jnp.float32):
    """Deterministic synthetic init, shapes matching the nn.Linear layers.

    linear_1: (hid, in)  -> stored transposed as (in, hid)
    linear_3: (1, hid)   -> stored transposed as (hid, 1)
    (linear_2 exists in the PyTorch module but is unused for n_layers=2.)
    """
    k1, k2, k3, k4 = jax.random.split(key, 4)
    s1 = 1.0 / jnp.sqrt(jnp.float32(in_feats))
    s3 = 1.0 / jnp.sqrt(jnp.float32(hid_feats))
    w1_t = jax.random.uniform(k1, (in_feats, hid_feats), dtype, -s1, s1)
    b1 = jax.random.uniform(k2, (1, hid_feats), dtype, -s1, s1)
    w3_t = jax.random.uniform(k3, (hid_feats, 1), dtype, -s3, s3)
    b3 = jax.random.uniform(k4, (1, 1), dtype, -s3, s3)
    return (w1_t, b1, w3_t, b3)


def reference_forward(params, zi, zj, zn, pos_edges, neg_edges):
    """Pure-JAX f32 reference for correctness checking."""
    w1_t, b1, w3_t, b3 = params
    pos_src, pos_dst = pos_edges
    raw = jnp.concatenate([zi[pos_src], zj[pos_dst]], axis=1)
    h = jnp.maximum(raw @ w1_t + b1, 0.0)
    score = jax.nn.sigmoid(h @ w3_t + b3)
    return score, score  # neg_score uses pos_raw in the reference (bug preserved)


if __name__ == "__main__":
    # Small deterministic example.
    N = 64            # number of src/dst nodes
    D = 16            # node feature dim
    in_feats = 2 * D  # concat of (hi, hj)
    hid_feats = 32
    E = 300           # deliberately NOT a multiple of the tile -> exercises padding

    key = jax.random.PRNGKey(0)
    kz, kp, ke = jax.random.split(key, 3)
    kzi, kzj, kzn = jax.random.split(kz, 3)
    zi = jax.random.normal(kzi, (N, D), jnp.float32)
    zj = jax.random.normal(kzj, (N, D), jnp.float32)
    zn = jax.random.normal(kzn, (N, D), jnp.float32)

    ks1, ks2, ks3, ks4 = jax.random.split(ke, 4)
    pos_edges = (jax.random.randint(ks1, (E,), 0, N, jnp.int32),
                 jax.random.randint(ks2, (E,), 0, N, jnp.int32))
    neg_edges = (jax.random.randint(ks3, (E,), 0, N, jnp.int32),
                 jax.random.randint(ks4, (E,), 0, N, jnp.int32))

    params = init_params(kp, in_feats, hid_feats)

    # Default path: bf16 matmul inputs, f32 accumulation / epilogue.
    pos_score, neg_score = graph_lp_forward(params, zi, zj, zn, pos_edges, neg_edges)
    jax.block_until_ready((pos_score, neg_score))

    ref_pos, ref_neg = reference_forward(params, zi, zj, zn, pos_edges, neg_edges)
    assert pos_score.shape == (E, 1) and neg_score.shape == (E, 1)
    # bf16 matmul inputs -> loosened tolerance (epilogue is exact f32).
    assert jnp.allclose(pos_score, ref_pos, atol=3e-2, rtol=0), "bf16 pos_score mismatch"
    assert jnp.allclose(neg_score, ref_neg, atol=3e-2, rtol=0), "bf16 neg_score mismatch"

    # Full-f32 path: should match the reference to numerical noise.
    pos_f32, neg_f32 = graph_lp_forward(params, zi, zj, zn, pos_edges, neg_edges,
                                        matmul_dtype=jnp.float32)
    jax.block_until_ready((pos_f32, neg_f32))
    assert jnp.allclose(pos_f32, ref_pos, atol=1e-4, rtol=0), "f32 pos_score mismatch"
    assert jnp.allclose(neg_f32, ref_neg, atol=1e-4, rtol=0), "f32 neg_score mismatch"

    print("KERNEL_OK")
</pallas_src>

<mosaic_0001>
module attributes {stable_mosaic.version = 11 : i64} {
  func.func @_lp_mlp_kernel(%arg0: i32, %arg1: memref<512x16xbf16, #tpu.memory_space<vmem>>, %arg2: memref<512x16xbf16, #tpu.memory_space<vmem>>, %arg3: memref<16x32xbf16, #tpu.memory_space<vmem>>, %arg4: memref<16x32xbf16, #tpu.memory_space<vmem>>, %arg5: memref<1x32xf32, #tpu.memory_space<vmem>>, %arg6: memref<1x32xf32, #tpu.memory_space<vmem>>, %arg7: memref<1x1xf32, #tpu.memory_space<smem>>, %arg8: memref<512x1xf32, #tpu.memory_space<vmem>>) attributes {dimension_semantics = [#tpu.dimension_semantics<parallel>], iteration_bounds = array<i64: 1>, scalar_prefetch = 0 : i64, scratch_operands = 0 : i64, tpu.core_type = #tpu.core_type<tc>, window_params = [{transform_indices = @transform_0, window_bounds = array<i64: 512, 16>}, {transform_indices = @transform_1, window_bounds = array<i64: 512, 16>}, {pipeline_mode = #tpu.pipeline_mode<synchronous>, transform_indices = @transform_2, window_bounds = array<i64: 16, 32>}, {pipeline_mode = #tpu.pipeline_mode<synchronous>, transform_indices = @transform_3, window_bounds = array<i64: 16, 32>}, {pipeline_mode = #tpu.pipeline_mode<synchronous>, transform_indices = @transform_4, window_bounds = array<i64: 1, 32>}, {pipeline_mode = #tpu.pipeline_mode<synchronous>, transform_indices = @transform_5, window_bounds = array<i64: 1, 32>}, {transform_indices = @transform_6, window_bounds = array<i64: 1, 1>}, {transform_indices = @transform_7, window_bounds = array<i64: 512, 1>}]} {
    %c0 = arith.constant 0 : index
    %c0_0 = arith.constant 0 : index
    %0 = vector.load %arg1[%c0, %c0_0] : memref<512x16xbf16, #tpu.memory_space<vmem>>, vector<512x16xbf16>
    %c0_1 = arith.constant 0 : index
    %c0_2 = arith.constant 0 : index
    %1 = vector.load %arg3[%c0_1, %c0_2] : memref<16x32xbf16, #tpu.memory_space<vmem>>, vector<16x32xbf16>
    %cst = arith.constant dense<0.000000e+00> : vector<512x32xf32>
    %2 = tpu.matmul %0, %1, %cst {dimension_numbers = #tpu.dot_dimension_numbers<[1], [0], [0], [1], [0, 0, 1, 1], [], []>} : vector<512x16xbf16>, vector<16x32xbf16>, vector<512x32xf32> -> vector<512x32xf32>
    %c0_3 = arith.constant 0 : index
    %c0_4 = arith.constant 0 : index
    %3 = vector.load %arg2[%c0_3, %c0_4] : memref<512x16xbf16, #tpu.memory_space<vmem>>, vector<512x16xbf16>
    %c0_5 = arith.constant 0 : index
    %c0_6 = arith.constant 0 : index
    %4 = vector.load %arg4[%c0_5, %c0_6] : memref<16x32xbf16, #tpu.memory_space<vmem>>, vector<16x32xbf16>
    %cst_7 = arith.constant dense<0.000000e+00> : vector<512x32xf32>
    %5 = tpu.matmul %3, %4, %cst_7 {dimension_numbers = #tpu.dot_dimension_numbers<[1], [0], [0], [1], [0, 0, 1, 1], [], []>} : vector<512x16xbf16>, vector<16x32xbf16>, vector<512x32xf32> -> vector<512x32xf32>
    %6 = arith.addf %2, %5 : vector<512x32xf32>
    %c0_8 = arith.constant 0 : index
    %c0_9 = arith.constant 0 : index
    %7 = vector.load %arg5[%c0_8, %c0_9] : memref<1x32xf32, #tpu.memory_space<vmem>>, vector<1x32xf32>
    %8 = vector.broadcast %7 : vector<1x32xf32> to vector<512x32xf32>
    %9 = arith.addf %6, %8 : vector<512x32xf32>
    %cst_10 = arith.constant 0.000000e+00 : f32
    %10 = vector.broadcast %cst_10 : f32 to vector<512x32xf32>
    %11 = arith.maximumf %9, %10 : vector<512x32xf32>
    %c0_11 = arith.constant 0 : index
    %c0_12 = arith.constant 0 : index
    %12 = vector.load %arg6[%c0_11, %c0_12] : memref<1x32xf32, #tpu.memory_space<vmem>>, vector<1x32xf32>
    %13 = vector.broadcast %12 : vector<1x32xf32> to vector<512x32xf32>
    %14 = arith.mulf %11, %13 : vector<512x32xf32>
    %cst_13 = arith.constant dense<0.000000e+00> : vector<512xf32>
    %15 = vector.multi_reduction <add>, %14, %cst_13 [1] : vector<512x32xf32> to vector<512xf32>
    %16 = vector.shape_cast %15 : vector<512xf32> to vector<512x1xf32>
    %c0_14 = arith.constant 0 : index
    %c0_15 = arith.constant 0 : index
    %17 = memref.load %arg7[%c0_14, %c0_15] : memref<1x1xf32, #tpu.memory_space<smem>>
    %18 = vector.broadcast %17 : f32 to vector<512x1xf32>
    %19 = arith.addf %16, %18 : vector<512x1xf32>
    %20 = math.absf %19 : vector<512x1xf32>
    %cst_16 = arith.constant 0.000000e+00 : f32
    %21 = vector.broadcast %cst_16 : f32 to vector<512x1xf32>
    %22 = arith.subf %21, %20 : vector<512x1xf32>
    %23 = math.exp %22 : vector<512x1xf32>
    %cst_17 = arith.constant 1.000000e+00 : f32
    %24 = vector.broadcast %cst_17 : f32 to vector<512x1xf32>
    %25 = arith.addf %24, %23 : vector<512x1xf32>
    %cst_18 = arith.constant 1.000000e+00 : f32
    %26 = vector.broadcast %cst_18 : f32 to vector<512x1xf32>
    %27 = arith.divf %26, %25 : vector<512x1xf32>
    %cst_19 = arith.constant 0.000000e+00 : f32
    %28 = vector.broadcast %cst_19 : f32 to vector<512x1xf32>
    %29 = arith.cmpf oge, %19, %28 : vector<512x1xf32>
    %30 = arith.mulf %23, %27 : vector<512x1xf32>
    %31 = arith.select %29, %27, %30 : vector<512x1xi1>, vector<512x1xf32>
    %c0_20 = arith.constant 0 : index
    %c0_21 = arith.constant 0 : index
    %32 = vector.load %arg8[%c0_20, %c0_21] : memref<512x1xf32, #tpu.memory_space<vmem>>, vector<512x1xf32>
    tpu.vector_store %arg8[%c0_20, %c0_21], %31 {strides = array<i32>} : memref<512x1xf32, #tpu.memory_space<vmem>>, vector<512x1xf32>,
    return
  }
  func.func @transform_0(%arg0: i32) -> (i32, i32) {
    %c0_i32 = arith.constant 0 : i32
    %c0_i32_0 = arith.constant 0 : i32
    return %arg0, %c0_i32 : i32, i32
  }
  func.func @transform_1(%arg0: i32) -> (i32, i32) {
    %c0_i32 = arith.constant 0 : i32
    %c0_i32_0 = arith.constant 0 : i32
    return %arg0, %c0_i32 : i32, i32
  }
  func.func @transform_2(%arg0: i32) -> (i32, i32) {
    %c0_i32 = arith.constant 0 : i32
    %c0_i32_0 = arith.constant 0 : i32
    %c0_i32_1 = arith.constant 0 : i32
    return %c0_i32, %c0_i32_0 : i32, i32
  }
  func.func @transform_3(%arg0: i32) -> (i32, i32) {
    %c0_i32 = arith.constant 0 : i32
    %c0_i32_0 = arith.constant 0 : i32
    %c0_i32_1 = arith.constant 0 : i32
    return %c0_i32, %c0_i32_0 : i32, i32
  }
  func.func @transform_4(%arg0: i32) -> (i32, i32) {
    %c0_i32 = arith.constant 0 : i32
    %c0_i32_0 = arith.constant 0 : i32
    %c0_i32_1 = arith.constant 0 : i32
    return %c0_i32, %c0_i32_0 : i32, i32
  }
  func.func @transform_5(%arg0: i32) -> (i32, i32) {
    %c0_i32 = arith.constant 0 : i32
    %c0_i32_0 = arith.constant 0 : i32
    %c0_i32_1 = arith.constant 0 : i32
    return %c0_i32, %c0_i32_0 : i32, i32
  }
  func.func @transform_6(%arg0: i32) -> (i32, i32) {
    %c0_i32 = arith.constant 0 : i32
    %c0_i32_0 = arith.constant 0 : i32
    %c0_i32_1 = arith.constant 0 : i32
    return %c0_i32, %c0_i32_0 : i32, i32
  }
  func.func @transform_7(%arg0: i32) -> (i32, i32) {
    %c0_i32 = arith.constant 0 : i32
    %c0_i32_0 = arith.constant 0 : i32
    return %arg0, %c0_i32 : i32, i32
  }
}

</mosaic_0001>

<llo_original>
// kernel: tpu_custom_call.1
$region0: #{tpu_custom_call.1}
  #allocation0 [shape = 'u32[]', space=smem, size = 0x4, offset = 0x4, fixed_abs, tag = 'smem constant byte address 0x4 - core index']
  #allocation1 [shape = 'u32[72,128]{1,0:T(1,128)}', space=vmem, size = 0x9000, scoped, tag = 'internal scratch']
  #allocation2 [shape = 'f32[1,1]{1,0:T(1,128)S(6)}', space=smem, size = 0x200, scoped, tag = 'scoped memory for tpu_custom_call.1']
  %s0 = inlined_call_operand.vmem [shape: bf16[512,16], index: 0, kind: input, shape index: {}]
  %s1 = inlined_call_operand.vmem [shape: bf16[512,16], index: 1, kind: input, shape index: {}]
  %s2 = inlined_call_operand.vmem [shape: bf16[16,32], index: 2, kind: input, shape index: {}]
  %s3 = inlined_call_operand.vmem [shape: bf16[16,32], index: 3, kind: input, shape index: {}]
  %s4 = inlined_call_operand.vmem [shape: f32[1,32], index: 4, kind: input, shape index: {}]
  %s5 = inlined_call_operand.vmem [shape: f32[1,32], index: 5, kind: input, shape index: {}]
  %s6 = inlined_call_operand.<no memory space> [shape: f32[1,1], index: 6, kind: input, shape index: {}]
  %s7 = inlined_call_operand.vmem [shape: f32[512,1], index: 7, kind: output, shape index: {}]
  %s8 = sld [smem:[#allocation0]]
  $region38: #{tpu_custom_call.1} parent=0
    _
  %s10 = ssub.s32 1, %s8
  %s11 = scalar_select 0, %s10, %s8
  %12 = sst [smem:[#allocation2]] %s6
  // Predicated region
  $region2: #{tpu_custom_call.1} parent=0 // pred_check
    _
  $region3: #{tpu_custom_call.1} parent=0 // pred_check_branch
    %14 = sbr.rel (0) target = $region5
  $region4: #{tpu_custom_call.1} parent=0 // pred_region
    _
  $region5: #{tpu_custom_call.1} parent=0 // pred_fallthru
    _
  // Predicated region
  $region6: #{tpu_custom_call.1} parent=0 // pred_check
    _
  $region7: #{tpu_custom_call.1} parent=0 // pred_check_branch
    %16 = sbr.rel (0) target = $region9
  $region8: #{tpu_custom_call.1} parent=0 // pred_region
    _
  $region9: #{tpu_custom_call.1} parent=0 // pred_fallthru
    _
  // Predicated region
  $region10: #{tpu_custom_call.1} parent=0 // pred_check
    _
  $region11: #{tpu_custom_call.1} parent=0 // pred_check_branch
    %18 = sbr.rel (0) target = $region13
  $region12: #{tpu_custom_call.1} parent=0 // pred_region
    _
  $region13: #{tpu_custom_call.1} parent=0 // pred_fallthru
    _
  // Predicated region
  $region14: #{tpu_custom_call.1} parent=0 // pred_check
    _
  $region15: #{tpu_custom_call.1} parent=0 // pred_check_branch
    %20 = sbr.rel (0) target = $region17
  $region16: #{tpu_custom_call.1} parent=0 // pred_region
    _
  $region17: #{tpu_custom_call.1} parent=0 // pred_fallthru
    _
  // Predicated region
  $region18: #{tpu_custom_call.1} parent=0 // pred_check
    _
  $region19: #{tpu_custom_call.1} parent=0 // pred_check_branch
    %22 = sbr.rel (0) target = $region21
  $region20: #{tpu_custom_call.1} parent=0 // pred_region
    _
  $region21: #{tpu_custom_call.1} parent=0 // pred_fallthru
    _
  // Predicated region
  $region22: #{tpu_custom_call.1} parent=0 // pred_check
    _
  $region23: #{tpu_custom_call.1} parent=0 // pred_check_branch
    %24 = sbr.rel (0) target = $region25
  $region24: #{tpu_custom_call.1} parent=0 // pred_region
    _
  $region25: #{tpu_custom_call.1} parent=0 // pred_fallthru
    _
  // Predicated region
  $region26: #{tpu_custom_call.1} parent=0 // pred_check
    _
  $region27: #{tpu_custom_call.1} parent=0 // pred_check_branch
    %26 = sbr.rel (0) target = $region29
  $region28: #{tpu_custom_call.1} parent=0 // pred_region
    _
  $region29: #{tpu_custom_call.1} parent=0 // pred_fallthru
    _
  %v28 = vld [vmem:[%s0] sm:$0xf]
  %v29 = vld [vmem:[%s0 + $0x4] sm:$0xf]
  %v30 = vld [vmem:[%s0 + $0x8] sm:$0xf]
  %v31 = vld [vmem:[%s0 + $0xc] sm:$0xf]
  %v32 = vld [vmem:[%s0 + $0x10] sm:$0xf]
  %v33 = vld [vmem:[%s0 + $0x14] sm:$0xf]
  %v34 = vld [vmem:[%s0 + $0x18] sm:$0xf]
  %v35 = vld [vmem:[%s0 + $0x1c] sm:$0xf]
  %v36 = vld [vmem:[%s0 + $0x20] sm:$0xf]
  %v37 = vld [vmem:[%s0 + $0x24] sm:$0xf]
  %v38 = vld [vmem:[%s0 + $0x28] sm:$0xf]
  %v39 = vld [vmem:[%s0 + $0x2c] sm:$0xf]
  %v40 = vld [vmem:[%s0 + $0x30] sm:$0xf]
  %v41 = vld [vmem:[%s0 + $0x34] sm:$0xf]
  %v42 = vld [vmem:[%s0 + $0x38] sm:$0xf]
  %v43 = vld [vmem:[%s0 + $0x3c] sm:$0xf]
  %v44 = vld [vmem:[%s0 + $0x40] sm:$0xf]
  %v45 = vld [vmem:[%s0 + $0x44] sm:$0xf]
  %v46 = vld [vmem:[%s0 + $0x48] sm:$0xf]
  %v47 = vld [vmem:[%s0 + $0x4c] sm:$0xf]
  %v48 = vld [vmem:[%s0 + $0x50] sm:$0xf]
  %v49 = vld [vmem:[%s0 + $0x54] sm:$0xf]
  %v50 = vld [vmem:[%s0 + $0x58] sm:$0xf]
  %v51 = vld [vmem:[%s0 + $0x5c] sm:$0xf]
  %v52 = vld [vmem:[%s0 + $0x60] sm:$0xf]
  %v53 = vld [vmem:[%s0 + $0x64] sm:$0xf]
  %v54 = vld [vmem:[%s0 + $0x68] sm:$0xf]
  %v55 = vld [vmem:[%s0 + $0x6c] sm:$0xf]
  %v56 = vld [vmem:[%s0 + $0x70] sm:$0xf]
  %v57 = vld [vmem:[%s0 + $0x74] sm:$0xf]
  %v58 = vld [vmem:[%s0 + $0x78] sm:$0xf]
  %v59 = vld [vmem:[%s0 + $0x7c] sm:$0xf]
  %v60 = vld [vmem:[%s0 + $0x80] sm:$0xf]
  %v61 = vld [vmem:[%s0 + $0x84] sm:$0xf]
  %v62 = vld [vmem:[%s0 + $0x88] sm:$0xf]
  %v63 = vld [vmem:[%s0 + $0x8c] sm:$0xf]
  %v64 = vld [vmem:[%s0 + $0x90] sm:$0xf]
  %v65 = vld [vmem:[%s0 + $0x94] sm:$0xf]
  %v66 = vld [vmem:[%s0 + $0x98] sm:$0xf]
  %v67 = vld [vmem:[%s0 + $0x9c] sm:$0xf]
  %v68 = vld [vmem:[%s0 + $0xa0] sm:$0xf]
  %v69 = vld [vmem:[%s0 + $0xa4] sm:$0xf]
  %v70 = vld [vmem:[%s0 + $0xa8] sm:$0xf]
  %v71 = vld [vmem:[%s0 + $0xac] sm:$0xf]
  %v72 = vld [vmem:[%s0 + $0xb0] sm:$0xf]
  %v73 = vld [vmem:[%s0 + $0xb4] sm:$0xf]
  %v74 = vld [vmem:[%s0 + $0xb8] sm:$0xf]
  %v75 = vld [vmem:[%s0 + $0xbc] sm:$0xf]
  %v76 = vld [vmem:[%s0 + $0xc0] sm:$0xf]
  %v77 = vld [vmem:[%s0 + $0xc4] sm:$0xf]
  %v78 = vld [vmem:[%s0 + $0xc8] sm:$0xf]
  %v79 = vld [vmem:[%s0 + $0xcc] sm:$0xf]
  %v80 = vld [vmem:[%s0 + $0xd0] sm:$0xf]
  %v81 = vld [vmem:[%s0 + $0xd4] sm:$0xf]
  %v82 = vld [vmem:[%s0 + $0xd8] sm:$0xf]
  %v83 = vld [vmem:[%s0 + $0xdc] sm:$0xf]
  %v84 = vld [vmem:[%s0 + $0xe0] sm:$0xf]
  %v85 = vld [vmem:[%s0 + $0xe4] sm:$0xf]
  %v86 = vld [vmem:[%s0 + $0xe8] sm:$0xf]
  %v87 = vld [vmem:[%s0 + $0xec] sm:$0xf]
  %v88 = vld [vmem:[%s0 + $0xf0] sm:$0xf]
  %v89 = vld [vmem:[%s0 + $0xf4] sm:$0xf]
  %v90 = vld [vmem:[%s0 + $0xf8] sm:$0xf]
  %v91 = vld [vmem:[%s0 + $0xfc] sm:$0xf]
  %v92 = vld [vmem:[%s2] sm:$0xf]
  %v93 = vld [vmem:[%s2 + $0x4] sm:$0xf]
  %v94 = vld [vmem:[%s1] sm:$0xf]
  %v95 = vld [vmem:[%s1 + $0x4] sm:$0xf]
  %v96 = vld [vmem:[%s1 + $0x8] sm:$0xf]
  %v97 = vld [vmem:[%s1 + $0xc] sm:$0xf]
  %v98 = vld [vmem:[%s1 + $0x10] sm:$0xf]
  %v99 = vld [vmem:[%s1 + $0x14] sm:$0xf]
  %v100 = vld [vmem:[%s1 + $0x18] sm:$0xf]
  %v101 = vld [vmem:[%s1 + $0x1c] sm:$0xf]
  %v102 = vld [vmem:[%s1 + $0x20] sm:$0xf]
  %v103 = vld [vmem:[%s1 + $0x24] sm:$0xf]
  %v104 = vld [vmem:[%s1 + $0x28] sm:$0xf]
  %v105 = vld [vmem:[%s1 + $0x2c] sm:$0xf]
  %v106 = vld [vmem:[%s1 + $0x30] sm:$0xf]
  %v107 = vld [vmem:[%s1 + $0x34] sm:$0xf]
  %v108 = vld [vmem:[%s1 + $0x38] sm:$0xf]
  %v109 = vld [vmem:[%s1 + $0x3c] sm:$0xf]
  %v110 = vld [vmem:[%s1 + $0x40] sm:$0xf]
  %v111 = vld [vmem:[%s1 + $0x44] sm:$0xf]
  %v112 = vld [vmem:[%s1 + $0x48] sm:$0xf]
  %v113 = vld [vmem:[%s1 + $0x4c] sm:$0xf]
  %v114 = vld [vmem:[%s1 + $0x50] sm:$0xf]
  %v115 = vld [vmem:[%s1 + $0x54] sm:$0xf]
  %v116 = vld [vmem:[%s1 + $0x58] sm:$0xf]
  %v117 = vld [vmem:[%s1 + $0x5c] sm:$0xf]
  %v118 = vld [vmem:[%s1 + $0x60] sm:$0xf]
  %v119 = vld [vmem:[%s1 + $0x64] sm:$0xf]
  %v120 = vld [vmem:[%s1 + $0x68] sm:$0xf]
  %v121 = vld [vmem:[%s1 + $0x6c] sm:$0xf]
  %v122 = vld [vmem:[%s1 + $0x70] sm:$0xf]
  %v123 = vld [vmem:[%s1 + $0x74] sm:$0xf]
  %v124 = vld [vmem:[%s1 + $0x78] sm:$0xf]
  %v125 = vld [vmem:[%s1 + $0x7c] sm:$0xf]
  %v126 = vld [vmem:[%s1 + $0x80] sm:$0xf]
  %v127 = vld [vmem:[%s1 + $0x84] sm:$0xf]
  %v128 = vld [vmem:[%s1 + $0x88] sm:$0xf]
  %v129 = vld [vmem:[%s1 + $0x8c] sm:$0xf]
  %v130 = vld [vmem:[%s1 + $0x90] sm:$0xf]
  %v131 = vld [vmem:[%s1 + $0x94] sm:$0xf]
  %v132 = vld [vmem:[%s1 + $0x98] sm:$0xf]
  %v133 = vld [vmem:[%s1 + $0x9c] sm:$0xf]
  %v134 = vld [vmem:[%s1 + $0xa0] sm:$0xf]
  %v135 = vld [vmem:[%s1 + $0xa4] sm:$0xf]
  %v136 = vld [vmem:[%s1 + $0xa8] sm:$0xf]
  %v137 = vld [vmem:[%s1 + $0xac] sm:$0xf]
  %v138 = vld [vmem:[%s1 + $0xb0] sm:$0xf]
  %v139 = vld [vmem:[%s1 + $0xb4] sm:$0xf]
  %v140 = vld [vmem:[%s1 + $0xb8] sm:$0xf]
  %v141 = vld [vmem:[%s1 + $0xbc] sm:$0xf]
  %v142 = vld [vmem:[%s1 + $0xc0] sm:$0xf]
  %v143 = vld [vmem:[%s1 + $0xc4] sm:$0xf]
  %v144 = vld [vmem:[%s1 + $0xc8] sm:$0xf]
  %v145 = vld [vmem:[%s1 + $0xcc] sm:$0xf]
  %v146 = vld [vmem:[%s1 + $0xd0] sm:$0xf]
  %v147 = vld [vmem:[%s1 + $0xd4] sm:$0xf]
  %v148 = vld [vmem:[%s1 + $0xd8] sm:$0xf]
  %v149 = vld [vmem:[%s1 + $0xdc] sm:$0xf]
  %v150 = vld [vmem:[%s1 + $0xe0] sm:$0xf]
  %v151 = vld [vmem:[%s1 + $0xe4] sm:$0xf]
  %v152 = vld [vmem:[%s1 + $0xe8] sm:$0xf]
  %v153 = vld [vmem:[%s1 + $0xec] sm:$0xf]
  %v154 = vld [vmem:[%s1 + $0xf0] sm:$0xf]
  %v155 = vld [vmem:[%s1 + $0xf4] sm:$0xf]
  %v156 = vld [vmem:[%s1 + $0xf8] sm:$0xf]
  %v157 = vld [vmem:[%s1 + $0xfc] sm:$0xf]
  %v158 = vld [vmem:[%s3] sm:$0xf]
  %v159 = vld [vmem:[%s3 + $0x4] sm:$0xf]
  %v224 = vunpack.c.l.b16 %v94
  %v225 = vunpack.c.l.b16 %v95
  %v226 = vunpack.c.l.b16 %v96
  %v227 = vunpack.c.l.b16 %v97
  %v228 = vunpack.c.l.b16 %v98
  %v229 = vunpack.c.l.b16 %v99
  %v230 = vunpack.c.l.b16 %v100
  %v231 = vunpack.c.l.b16 %v101
  %v232 = vunpack.c.l.b16 %v102
  %v233 = vunpack.c.l.b16 %v103
  %v234 = vunpack.c.l.b16 %v104
  %v235 = vunpack.c.l.b16 %v105
  %v236 = vunpack.c.l.b16 %v106
  %v237 = vunpack.c.l.b16 %v107
  %v238 = vunpack.c.l.b16 %v108
  %v239 = vunpack.c.l.b16 %v109
  %v240 = vunpack.c.l.b16 %v110
  %v241 = vunpack.c.l.b16 %v111
  %v242 = vunpack.c.l.b16 %v112
  %v243 = vunpack.c.l.b16 %v113
  %v244 = vunpack.c.l.b16 %v114
  %v245 = vunpack.c.l.b16 %v115
  %v246 = vunpack.c.l.b16 %v116
  %v247 = vunpack.c.l.b16 %v117
  %v248 = vunpack.c.l.b16 %v118
  %v249 = vunpack.c.l.b16 %v119
  %v250 = vunpack.c.l.b16 %v120
  %v251 = vunpack.c.l.b16 %v121
  %v252 = vunpack.c.l.b16 %v122
  %v253 = vunpack.c.l.b16 %v123
  %v254 = vunpack.c.l.b16 %v124
  %v255 = vunpack.c.l.b16 %v125
  %v256 = vunpack.c.l.b16 %v126
  %v257 = vunpack.c.l.b16 %v127
  %v258 = vunpack.c.l.b16 %v128
  %v259 = vunpack.c.l.b16 %v129
  %v260 = vunpack.c.l.b16 %v130
  %v261 = vunpack.c.l.b16 %v131
  %v262 = vunpack.c.l.b16 %v132
  %v263 = vunpack.c.l.b16 %v133
  %v264 = vunpack.c.l.b16 %v134
  %v265 = vunpack.c.l.b16 %v135
  %v266 = vunpack.c.l.b16 %v136
  %v267 = vunpack.c.l.b16 %v137
  %v268 = vunpack.c.l.b16 %v138
  %v269 = vunpack.c.l.b16 %v139
  %v270 = vunpack.c.l.b16 %v140
  %v271 = vunpack.c.l.b16 %v141
  %v272 = vunpack.c.l.b16 %v142
  %v273 = vunpack.c.l.b16 %v143
  %v274 = vunpack.c.l.b16 %v144
  %v275 = vunpack.c.l.b16 %v145
  %v276 = vunpack.c.l.b16 %v146
  %v277 = vunpack.c.l.b16 %v147
  %v278 = vunpack.c.l.b16 %v148
  %v279 = vunpack.c.l.b16 %v149
  %v280 = vunpack.c.l.b16 %v150
  %v281 = vunpack.c.l.b16 %v151
  %v282 = vunpack.c.l.b16 %v152
  %v283 = vunpack.c.l.b16 %v153
  %v284 = vunpack.c.l.b16 %v154
  %v285 = vunpack.c.l.b16 %v155
  %v286 = vunpack.c.l.b16 %v156
  %v287 = vunpack.c.l.b16 %v157
  %v288 = vpack.c.b16 %v225, %v224
  %v289 = vpack.c.b16 %v227, %v226
  %v290 = vpack.c.b16 %v229, %v228
  %v291 = vpack.c.b16 %v231, %v230
  %v292 = vpack.c.b16 %v233, %v232
  %v293 = vpack.c.b16 %v235, %v234
  %v294 = vpack.c.b16 %v237, %v236
  %v295 = vpack.c.b16 %v239, %v238
  %v296 = vpack.c.b16 %v241, %v240
  %v297 = vpack.c.b16 %v243, %v242
  %v298 = vpack.c.b16 %v245, %v244
  %v299 = vpack.c.b16 %v247, %v246
  %v300 = vpack.c.b16 %v249, %v248
  %v301 = vpack.c.b16 %v251, %v250
  %v302 = vpack.c.b16 %v253, %v252
  %v303 = vpack.c.b16 %v255, %v254
  %v304 = vpack.c.b16 %v257, %v256
  %v305 = vpack.c.b16 %v259, %v258
  %v306 = vpack.c.b16 %v261, %v260
  %v307 = vpack.c.b16 %v263, %v262
  %v308 = vpack.c.b16 %v265, %v264
  %v309 = vpack.c.b16 %v267, %v266
  %v310 = vpack.c.b16 %v269, %v268
  %v311 = vpack.c.b16 %v271, %v270
  %v312 = vpack.c.b16 %v273, %v272
  %v313 = vpack.c.b16 %v275, %v274
  %v314 = vpack.c.b16 %v277, %v276
  %v315 = vpack.c.b16 %v279, %v278
  %v316 = vpack.c.b16 %v281, %v280
  %v317 = vpack.c.b16 %v283, %v282
  %v318 = vpack.c.b16 %v285, %v284
  %v319 = vpack.c.b16 %v287, %v286
  %v322 = vunpack.c.l.b16 %v158
  %v323 = vunpack.c.l.b16 %v159
  %v324 = vpack.c.b16 %v323, %v322
  %vm326 = vcmask 130048
  %v328 = vsel %vm326, %v288, 0
  %v331 = vsel %vm326, %v289, 0
  %v334 = vsel %vm326, %v290, 0
  %v337 = vsel %vm326, %v291, 0
  %v340 = vsel %vm326, %v292, 0
  %v343 = vsel %vm326, %v293, 0
  %v346 = vsel %vm326, %v294, 0
  %v349 = vsel %vm326, %v295, 0
  %v352 = vsel %vm326, %v296, 0
  %v355 = vsel %vm326, %v297, 0
  %v358 = vsel %vm326, %v298, 0
  %v361 = vsel %vm326, %v299, 0
  %v364 = vsel %vm326, %v300, 0
  %v367 = vsel %vm326, %v301, 0
  %v370 = vsel %vm326, %v302, 0
  %v373 = vsel %vm326, %v303, 0
  %v376 = vsel %vm326, %v304, 0
  %v379 = vsel %vm326, %v305, 0
  %v382 = vsel %vm326, %v306, 0
  %v385 = vsel %vm326, %v307, 0
  %v388 = vsel %vm326, %v308, 0
  %v391 = vsel %vm326, %v309, 0
  %v394 = vsel %vm326, %v310, 0
  %v397 = vsel %vm326, %v311, 0
  %v400 = vsel %vm326, %v312, 0
  %v403 = vsel %vm326, %v313, 0
  %v406 = vsel %vm326, %v314, 0
  %v409 = vsel %vm326, %v315, 0
  %v412 = vsel %vm326, %v316, 0
  %v415 = vsel %vm326, %v317, 0
  %v418 = vsel %vm326, %v318, 0
  %v421 = vsel %vm326, %v319, 0
  %423 = vmatpush.bf16.msra.mxu0 0
  %424 = vmatpush.bf16.msra.mxu0 0
  %425 = vmatpush.bf16.msra.mxu0 0
  %426 = vmatpush.bf16.msra.mxu0 0
  %427 = vmatpush.bf16.msra.mxu0 0
  %428 = vmatpush.bf16.msra.mxu0 0
  %429 = vmatpush.bf16.msra.mxu0 0
  %430 = vmatpush.bf16.msra.mxu0 %v324
  %431 = vmatmul.bf16.gmra.mxu0 %v328
  %v432 = vpop.f32.mrf.mxu0
  %v433 = vadd.f32 0.0, %v432
  %v434 = vpop.f32.mrf.mxu0
  %v435 = vadd.f32 0.0, %v434
  %436 = vmatmul.bf16.gmra.mxu0 %v331
  %v437 = vpop.f32.mrf.mxu0
  %v438 = vadd.f32 0.0, %v437
  %v439 = vpop.f32.mrf.mxu0
  %v440 = vadd.f32 0.0, %v439
  %441 = vmatmul.bf16.gmra.mxu0 %v334
  %v442 = vpop.f32.mrf.mxu0
  %v443 = vadd.f32 0.0, %v442
  %v444 = vpop.f32.mrf.mxu0
  %v445 = vadd.f32 0.0, %v444
  %446 = vmatmul.bf16.gmra.mxu0 %v337
  %v447 = vpop.f32.mrf.mxu0
  %v448 = vadd.f32 0.0, %v447
  %v449 = vpop.f32.mrf.mxu0
  %v450 = vadd.f32 0.0, %v449
  %451 = vmatmul.bf16.gmra.mxu0 %v340
  %v452 = vpop.f32.mrf.mxu0
  %v453 = vadd.f32 0.0, %v452
  %v454 = vpop.f32.mrf.mxu0
  %v455 = vadd.f32 0.0, %v454
  %456 = vmatmul.bf16.gmra.mxu0 %v343
  %v457 = vpop.f32.mrf.mxu0
  %v458 = vadd.f32 0.0, %v457
  %v459 = vpop.f32.mrf.mxu0
  %v460 = vadd.f32 0.0, %v459
  %461 = vmatmul.bf16.gmra.mxu0 %v346
  %v462 = vpop.f32.mrf.mxu0
  %v463 = vadd.f32 0.0, %v462
  %v464 = vpop.f32.mrf.mxu0
  %v465 = vadd.f32 0.0, %v464
  %466 = vmatmul.bf16.gmra.mxu0 %v349
  %v467 = vpop.f32.mrf.mxu0
  %v468 = vadd.f32 0.0, %v467
  %v469 = vpop.f32.mrf.mxu0
  %v470 = vadd.f32 0.0, %v469
  %471 = vmatmul.bf16.gmra.mxu0 %v352
  %v472 = vpop.f32.mrf.mxu0
  %v473 = vadd.f32 0.0, %v472
  %v474 = vpop.f32.mrf.mxu0
  %v475 = vadd.f32 0.0, %v474
  %476 = vmatmul.bf16.gmra.mxu0 %v355
  %v477 = vpop.f32.mrf.mxu0
  %v478 = vadd.f32 0.0, %v477
  %v479 = vpop.f32.mrf.mxu0
  %v480 = vadd.f32 0.0, %v479
  %481 = vmatmul.bf16.gmra.mxu0 %v358
  %v482 = vpop.f32.mrf.mxu0
  %v483 = vadd.f32 0.0, %v482
  %v484 = vpop.f32.mrf.mxu0
  %v485 = vadd.f32 0.0, %v484
  %486 = vmatmul.bf16.gmra.mxu0 %v361
  %v487 = vpop.f32.mrf.mxu0
  %v488 = vadd.f32 0.0, %v487
  %v489 = vpop.f32.mrf.mxu0
  %v490 = vadd.f32 0.0, %v489
  %491 = vmatmul.bf16.gmra.mxu0 %v364
  %v492 = vpop.f32.mrf.mxu0
  %v493 = vadd.f32 0.0, %v492
  %v494 = vpop.f32.mrf.mxu0
  %v495 = vadd.f32 0.0, %v494
  %496 = vmatmul.bf16.gmra.mxu0 %v367
  %v497 = vpop.f32.mrf.mxu0
  %v498 = vadd.f32 0.0, %v497
  %v499 = vpop.f32.mrf.mxu0
  %v500 = vadd.f32 0.0, %v499
  %501 = vmatmul.bf16.gmra.mxu0 %v370
  %v502 = vpop.f32.mrf.mxu0
  %v503 = vadd.f32 0.0, %v502
  %v504 = vpop.f32.mrf.mxu0
  %v505 = vadd.f32 0.0, %v504
  %506 = vmatmul.bf16.gmra.mxu0 %v373
  %v507 = vpop.f32.mrf.mxu0
  %v508 = vadd.f32 0.0, %v507
  %v509 = vpop.f32.mrf.mxu0
  %v510 = vadd.f32 0.0, %v509
  %511 = vmatmul.bf16.gmra.mxu0 %v376
  %v512 = vpop.f32.mrf.mxu0
  %v513 = vadd.f32 0.0, %v512
  %v514 = vpop.f32.mrf.mxu0
  %v515 = vadd.f32 0.0, %v514
  %516 = vmatmul.bf16.gmra.mxu0 %v379
  %v517 = vpop.f32.mrf.mxu0
  %v518 = vadd.f32 0.0, %v517
  %v519 = vpop.f32.mrf.mxu0
  %v520 = vadd.f32 0.0, %v519
  %521 = vmatmul.bf16.gmra.mxu0 %v382
  %v522 = vpop.f32.mrf.mxu0
  %v523 = vadd.f32 0.0, %v522
  %v524 = vpop.f32.mrf.mxu0
  %v525 = vadd.f32 0.0, %v524
  %526 = vmatmul.bf16.gmra.mxu0 %v385
  %v527 = vpop.f32.mrf.mxu0
  %v528 = vadd.f32 0.0, %v527
  %v529 = vpop.f32.mrf.mxu0
  %v530 = vadd.f32 0.0, %v529
  %531 = vmatmul.bf16.gmra.mxu0 %v388
  %v532 = vpop.f32.mrf.mxu0
  %v533 = vadd.f32 0.0, %v532
  %v534 = vpop.f32.mrf.mxu0
  %v535 = vadd.f32 0.0, %v534
  %536 = vmatmul.bf16.gmra.mxu0 %v391
  %v537 = vpop.f32.mrf.mxu0
  %v538 = vadd.f32 0.0, %v537
  %v539 = vpop.f32.mrf.mxu0
  %v540 = vadd.f32 0.0, %v539
  %541 = vmatmul.bf16.gmra.mxu0 %v394
  %v542 = vpop.f32.mrf.mxu0
  %v543 = vadd.f32 0.0, %v542
  %v544 = vpop.f32.mrf.mxu0
  %v545 = vadd.f32 0.0, %v544
  %546 = vmatmul.bf16.gmra.mxu0 %v397
  %v547 = vpop.f32.mrf.mxu0
  %v548 = vadd.f32 0.0, %v547
  %v549 = vpop.f32.mrf.mxu0
  %v550 = vadd.f32 0.0, %v549
  %551 = vmatmul.bf16.gmra.mxu0 %v400
  %v552 = vpop.f32.mrf.mxu0
  %v553 = vadd.f32 0.0, %v552
  %v554 = vpop.f32.mrf.mxu0
  %v555 = vadd.f32 0.0, %v554
  %556 = vmatmul.bf16.gmra.mxu0 %v403
  %v557 = vpop.f32.mrf.mxu0
  %v558 = vadd.f32 0.0, %v557
  %v559 = vpop.f32.mrf.mxu0
  %v560 = vadd.f32 0.0, %v559
  %561 = vmatmul.bf16.gmra.mxu0 %v406
  %v562 = vpop.f32.mrf.mxu0
  %v563 = vadd.f32 0.0, %v562
  %v564 = vpop.f32.mrf.mxu0
  %v565 = vadd.f32 0.0, %v564
  %566 = vmatmul.bf16.gmra.mxu0 %v409
  %v567 = vpop.f32.mrf.mxu0
  %v568 = vadd.f32 0.0, %v567
  %v569 = vpop.f32.mrf.mxu0
  %v570 = vadd.f32 0.0, %v569
  %571 = vmatmul.bf16.gmra.mxu0 %v412
  %v572 = vpop.f32.mrf.mxu0
  %v573 = vadd.f32 0.0, %v572
  %v574 = vpop.f32.mrf.mxu0
  %v575 = vadd.f32 0.0, %v574
  %576 = vmatmul.bf16.gmra.mxu0 %v415
  %v577 = vpop.f32.mrf.mxu0
  %v578 = vadd.f32 0.0, %v577
  %v579 = vpop.f32.mrf.mxu0
  %v580 = vadd.f32 0.0, %v579
  %581 = vmatmul.bf16.gmra.mxu0 %v418
  %v582 = vpop.f32.mrf.mxu0
  %v583 = vadd.f32 0.0, %v582
  %v584 = vpop.f32.mrf.mxu0
  %v585 = vadd.f32 0.0, %v584
  %586 = vmatmul.bf16.gmra.mxu0 %v421
  %v587 = vpop.f32.mrf.mxu0
  %v588 = vadd.f32 0.0, %v587
  %v589 = vpop.f32.mrf.mxu0
  %v590 = vadd.f32 0.0, %v589
  %591 = vdwg.mxu0
  %v656 = vunpack.c.l.b16 %v28
  %v657 = vunpack.c.l.b16 %v29
  %v658 = vunpack.c.l.b16 %v30
  %v659 = vunpack.c.l.b16 %v31
  %v660 = vunpack.c.l.b16 %v32
  %v661 = vunpack.c.l.b16 %v33
  %v662 = vunpack.c.l.b16 %v34
  %v663 = vunpack.c.l.b16 %v35
  %v664 = vunpack.c.l.b16 %v36
  %v665 = vunpack.c.l.b16 %v37
  %v666 = vunpack.c.l.b16 %v38
  %v667 = vunpack.c.l.b16 %v39
  %v668 = vunpack.c.l.b16 %v40
  %v669 = vunpack.c.l.b16 %v41
  %v670 = vunpack.c.l.b16 %v42
  %v671 = vunpack.c.l.b16 %v43
  %v672 = vunpack.c.l.b16 %v44
  %v673 = vunpack.c.l.b16 %v45
  %v674 = vunpack.c.l.b16 %v46
  %v675 = vunpack.c.l.b16 %v47
  %v676 = vunpack.c.l.b16 %v48
  %v677 = vunpack.c.l.b16 %v49
  %v678 = vunpack.c.l.b16 %v50
  %v679 = vunpack.c.l.b16 %v51
  %v680 = vunpack.c.l.b16 %v52
  %v681 = vunpack.c.l.b16 %v53
  %v682 = vunpack.c.l.b16 %v54
  %v683 = vunpack.c.l.b16 %v55
  %v684 = vunpack.c.l.b16 %v56
  %v685 = vunpack.c.l.b16 %v57
  %v686 = vunpack.c.l.b16 %v58
  %v687 = vunpack.c.l.b16 %v59
  %v688 = vunpack.c.l.b16 %v60
  %v689 = vunpack.c.l.b16 %v61
  %v690 = vunpack.c.l.b16 %v62
  %v691 = vunpack.c.l.b16 %v63
  %v692 = vunpack.c.l.b16 %v64
  %v693 = vunpack.c.l.b16 %v65
  %v694 = vunpack.c.l.b16 %v66
  %v695 = vunpack.c.l.b16 %v67
  %v696 = vunpack.c.l.b16 %v68
  %v697 = vunpack.c.l.b16 %v69
  %v698 = vunpack.c.l.b16 %v70
  %v699 = vunpack.c.l.b16 %v71
  %v700 = vunpack.c.l.b16 %v72
  %v701 = vunpack.c.l.b16 %v73
  %v702 = vunpack.c.l.b16 %v74
  %v703 = vunpack.c.l.b16 %v75
  %v704 = vunpack.c.l.b16 %v76
  %v705 = vunpack.c.l.b16 %v77
  %v706 = vunpack.c.l.b16 %v78
  %v707 = vunpack.c.l.b16 %v79
  %v708 = vunpack.c.l.b16 %v80
  %v709 = vunpack.c.l.b16 %v81
  %v710 = vunpack.c.l.b16 %v82
  %v711 = vunpack.c.l.b16 %v83
  %v712 = vunpack.c.l.b16 %v84
  %v713 = vunpack.c.l.b16 %v85
  %v714 = vunpack.c.l.b16 %v86
  %v715 = vunpack.c.l.b16 %v87
  %v716 = vunpack.c.l.b16 %v88
  %v717 = vunpack.c.l.b16 %v89
  %v718 = vunpack.c.l.b16 %v90
  %v719 = vunpack.c.l.b16 %v91
  %v720 = vpack.c.b16 %v657, %v656
  %v721 = vpack.c.b16 %v659, %v658
  %v722 = vpack.c.b16 %v661, %v660
  %v723 = vpack.c.b16 %v663, %v662
  %v724 = vpack.c.b16 %v665, %v664
  %v725 = vpack.c.b16 %v667, %v666
  %v726 = vpack.c.b16 %v669, %v668
  %v727 = vpack.c.b16 %v671, %v670
  %v728 = vpack.c.b16 %v673, %v672
  %v729 = vpack.c.b16 %v675, %v674
  %v730 = vpack.c.b16 %v677, %v676
  %v731 = vpack.c.b16 %v679, %v678
  %v732 = vpack.c.b16 %v681, %v680
  %v733 = vpack.c.b16 %v683, %v682
  %v734 = vpack.c.b16 %v685, %v684
  %v735 = vpack.c.b16 %v687, %v686
  %v736 = vpack.c.b16 %v689, %v688
  %v737 = vpack.c.b16 %v691, %v690
  %v738 = vpack.c.b16 %v693, %v692
  %v739 = vpack.c.b16 %v695, %v694
  %v740 = vpack.c.b16 %v697, %v696
  %v741 = vpack.c.b16 %v699, %v698
  %v742 = vpack.c.b16 %v701, %v700
  %v743 = vpack.c.b16 %v703, %v702
  %v744 = vpack.c.b16 %v705, %v704
  %v745 = vpack.c.b16 %v707, %v706
  %v746 = vpack.c.b16 %v709, %v708
  %v747 = vpack.c.b16 %v711, %v710
  %v748 = vpack.c.b16 %v713, %v712
  %v749 = vpack.c.b16 %v715, %v714
  %v750 = vpack.c.b16 %v717, %v716
  %v751 = vpack.c.b16 %v719, %v718
  %v754 = vunpack.c.l.b16 %v92
  %v755 = vunpack.c.l.b16 %v93
  %v756 = vpack.c.b16 %v755, %v754
  %v759 = vsel %vm326, %v720, 0
  %v762 = vsel %vm326, %v721, 0
  %v765 = vsel %vm326, %v722, 0
  %v768 = vsel %vm326, %v723, 0
  %v771 = vsel %vm326, %v724, 0
  %v774 = vsel %vm326, %v725, 0
  %v777 = vsel %vm326, %v726, 0
  %v780 = vsel %vm326, %v727, 0
  %v783 = vsel %vm326, %v728, 0
  %v786 = vsel %vm326, %v729, 0
  %v789 = vsel %vm326, %v730, 0
  %v792 = vsel %vm326, %v731, 0
  %v795 = vsel %vm326, %v732, 0
  %v798 = vsel %vm326, %v733, 0
  %v801 = vsel %vm326, %v734, 0
  %v804 = vsel %vm326, %v735, 0
  %v807 = vsel %vm326, %v736, 0
  %v810 = vsel %vm326, %v737, 0
  %v813 = vsel %vm326, %v738, 0
  %v816 = vsel %vm326, %v739, 0
  %v819 = vsel %vm326, %v740, 0
  %v822 = vsel %vm326, %v741, 0
  %v825 = vsel %vm326, %v742, 0
  %v828 = vsel %vm326, %v743, 0
  %v831 = vsel %vm326, %v744, 0
  %v834 = vsel %vm326, %v745, 0
  %v837 = vsel %vm326, %v746, 0
  %v840 = vsel %vm326, %v747, 0
  %v843 = vsel %vm326, %v748, 0
  %v846 = vsel %vm326, %v749, 0
  %v849 = vsel %vm326, %v750, 0
  %v852 = vsel %vm326, %v751, 0
  %854 = vmatpush.bf16.msra.mxu0 0
  %855 = vmatpush.bf16.msra.mxu0 0
  %856 = vmatpush.bf16.msra.mxu0 0
  %857 = vmatpush.bf16.msra.mxu0 0
  %858 = vmatpush.bf16.msra.mxu0 0
  %859 = vmatpush.bf16.msra.mxu0 0
  %860 = vmatpush.bf16.msra.mxu0 0
  %861 = vmatpush.bf16.msra.mxu0 %v756
  %862 = vmatmul.bf16.gmra.mxu0 %v759
  %v863 = vpop.f32.mrf.mxu0
  %v864 = vadd.f32 %v433, %v863
  %v865 = vpop.f32.mrf.mxu0
  %v866 = vadd.f32 %v435, %v865
  %867 = vmatmul.bf16.gmra.mxu0 %v762
  %v868 = vpop.f32.mrf.mxu0
  %v869 = vadd.f32 %v438, %v868
  %v870 = vpop.f32.mrf.mxu0
  %v871 = vadd.f32 %v440, %v870
  %872 = vmatmul.bf16.gmra.mxu0 %v765
  %v873 = vpop.f32.mrf.mxu0
  %v874 = vadd.f32 %v443, %v873
  %v875 = vpop.f32.mrf.mxu0
  %v876 = vadd.f32 %v445, %v875
  %877 = vmatmul.bf16.gmra.mxu0 %v768
  %v878 = vpop.f32.mrf.mxu0
  %v879 = vadd.f32 %v448, %v878
  %v880 = vpop.f32.mrf.mxu0
  %v881 = vadd.f32 %v450, %v880
  %882 = vmatmul.bf16.gmra.mxu0 %v771
  %v883 = vpop.f32.mrf.mxu0
  %v884 = vadd.f32 %v453, %v883
  %v885 = vpop.f32.mrf.mxu0
  %v886 = vadd.f32 %v455, %v885
  %887 = vmatmul.bf16.gmra.mxu0 %v774
  %v888 = vpop.f32.mrf.mxu0
  %v889 = vadd.f32 %v458, %v888
  %v890 = vpop.f32.mrf.mxu0
  %v891 = vadd.f32 %v460, %v890
  %892 = vmatmul.bf16.gmra.mxu0 %v777
  %v893 = vpop.f32.mrf.mxu0
  %v894 = vadd.f32 %v463, %v893
  %v895 = vpop.f32.mrf.mxu0
  %v896 = vadd.f32 %v465, %v895
  %897 = vmatmul.bf16.gmra.mxu0 %v780
  %v898 = vpop.f32.mrf.mxu0
  %v899 = vadd.f32 %v468, %v898
  %v900 = vpop.f32.mrf.mxu0
  %v901 = vadd.f32 %v470, %v900
  %902 = vmatmul.bf16.gmra.mxu0 %v783
  %v903 = vpop.f32.mrf.mxu0
  %v904 = vadd.f32 %v473, %v903
  %v905 = vpop.f32.mrf.mxu0
  %v906 = vadd.f32 %v475, %v905
  %907 = vmatmul.bf16.gmra.mxu0 %v786
  %v908 = vpop.f32.mrf.mxu0
  %v909 = vadd.f32 %v478, %v908
  %v910 = vpop.f32.mrf.mxu0
  %v911 = vadd.f32 %v480, %v910
  %912 = vmatmul.bf16.gmra.mxu0 %v789
  %v913 = vpop.f32.mrf.mxu0
  %v914 = vadd.f32 %v483, %v913
  %v915 = vpop.f32.mrf.mxu0
  %v916 = vadd.f32 %v485, %v915
  %917 = vmatmul.bf16.gmra.mxu0 %v792
  %v918 = vpop.f32.mrf.mxu0
  %v919 = vadd.f32 %v488, %v918
  %v920 = vpop.f32.mrf.mxu0
  %v921 = vadd.f32 %v490, %v920
  %922 = vmatmul.bf16.gmra.mxu0 %v795
  %v923 = vpop.f32.mrf.mxu0
  %v924 = vadd.f32 %v493, %v923
  %v925 = vpop.f32.mrf.mxu0
  %v926 = vadd.f32 %v495, %v925
  %927 = vmatmul.bf16.gmra.mxu0 %v798
  %v928 = vpop.f32.mrf.mxu0
  %v929 = vadd.f32 %v498, %v928
  %v930 = vpop.f32.mrf.mxu0
  %v931 = vadd.f32 %v500, %v930
  %932 = vmatmul.bf16.gmra.mxu0 %v801
  %v933 = vpop.f32.mrf.mxu0
  %v934 = vadd.f32 %v503, %v933
  %v935 = vpop.f32.mrf.mxu0
  %v936 = vadd.f32 %v505, %v935
  %937 = vmatmul.bf16.gmra.mxu0 %v804
  %v938 = vpop.f32.mrf.mxu0
  %v939 = vadd.f32 %v508, %v938
  %v940 = vpop.f32.mrf.mxu0
  %v941 = vadd.f32 %v510, %v940
  %942 = vmatmul.bf16.gmra.mxu0 %v807
  %v943 = vpop.f32.mrf.mxu0
  %v944 = vadd.f32 %v513, %v943
  %v945 = vpop.f32.mrf.mxu0
  %v946 = vadd.f32 %v515, %v945
  %947 = vmatmul.bf16.gmra.mxu0 %v810
  %v948 = vpop.f32.mrf.mxu0
  %v949 = vadd.f32 %v518, %v948
  %v950 = vpop.f32.mrf.mxu0
  %v951 = vadd.f32 %v520, %v950
  %952 = vmatmul.bf16.gmra.mxu0 %v813
  %v953 = vpop.f32.mrf.mxu0
  %v954 = vadd.f32 %v523, %v953
  %v955 = vpop.f32.mrf.mxu0
  %v956 = vadd.f32 %v525, %v955
  %957 = vmatmul.bf16.gmra.mxu0 %v816
  %v958 = vpop.f32.mrf.mxu0
  %v959 = vadd.f32 %v528, %v958
  %v960 = vpop.f32.mrf.mxu0
  %v961 = vadd.f32 %v530, %v960
  %962 = vmatmul.bf16.gmra.mxu0 %v819
  %v963 = vpop.f32.mrf.mxu0
  %v964 = vadd.f32 %v533, %v963
  %v965 = vpop.f32.mrf.mxu0
  %v966 = vadd.f32 %v535, %v965
  %967 = vmatmul.bf16.gmra.mxu0 %v822
  %v968 = vpop.f32.mrf.mxu0
  %v969 = vadd.f32 %v538, %v968
  %v970 = vpop.f32.mrf.mxu0
  %v971 = vadd.f32 %v540, %v970
  %972 = vmatmul.bf16.gmra.mxu0 %v825
  %v973 = vpop.f32.mrf.mxu0
  %v974 = vadd.f32 %v543, %v973
  %v975 = vpop.f32.mrf.mxu0
  %v976 = vadd.f32 %v545, %v975
  %977 = vmatmul.bf16.gmra.mxu0 %v828
  %v978 = vpop.f32.mrf.mxu0
  %v979 = vadd.f32 %v548, %v978
  %v980 = vpop.f32.mrf.mxu0
  %v981 = vadd.f32 %v550, %v980
  %982 = vmatmul.bf16.gmra.mxu0 %v831
  %v983 = vpop.f32.mrf.mxu0
  %v984 = vadd.f32 %v553, %v983
  %v985 = vpop.f32.mrf.mxu0
  %v986 = vadd.f32 %v555, %v985
  %987 = vmatmul.bf16.gmra.mxu0 %v834
  %v988 = vpop.f32.mrf.mxu0
  %v989 = vadd.f32 %v558, %v988
  %v990 = vpop.f32.mrf.mxu0
  %v991 = vadd.f32 %v560, %v990
  %992 = vmatmul.bf16.gmra.mxu0 %v837
  %v993 = vpop.f32.mrf.mxu0
  %v994 = vadd.f32 %v563, %v993
  %v995 = vpop.f32.mrf.mxu0
  %v996 = vadd.f32 %v565, %v995
  %997 = vmatmul.bf16.gmra.mxu0 %v840
  %v998 = vpop.f32.mrf.mxu0
  %v999 = vadd.f32 %v568, %v998
  %v1000 = vpop.f32.mrf.mxu0
  %v1001 = vadd.f32 %v570, %v1000
  %1002 = vmatmul.bf16.gmra.mxu0 %v843
  %v1003 = vpop.f32.mrf.mxu0
  %v1004 = vadd.f32 %v573, %v1003
  %v1005 = vpop.f32.mrf.mxu0
  %v1006 = vadd.f32 %v575, %v1005
  %1007 = vmatmul.bf16.gmra.mxu0 %v846
  %v1008 = vpop.f32.mrf.mxu0
  %v1009 = vadd.f32 %v578, %v1008
  %v1010 = vpop.f32.mrf.mxu0
  %v1011 = vadd.f32 %v580, %v1010
  %1012 = vmatmul.bf16.gmra.mxu0 %v849
  %v1013 = vpop.f32.mrf.mxu0
  %v1014 = vadd.f32 %v583, %v1013
  %v1015 = vpop.f32.mrf.mxu0
  %v1016 = vadd.f32 %v585, %v1015
  %1017 = vmatmul.bf16.gmra.mxu0 %v852
  %v1018 = vpop.f32.mrf.mxu0
  %v1019 = vadd.f32 %v588, %v1018
  %v1020 = vpop.f32.mrf.mxu0
  %v1021 = vadd.f32 %v590, %v1020
  %1022 = vdwg.mxu0
  %v1023 = vld [vmem:[%s4] sm:$0x1]
  %v1025 = vperm.slane %v1023, 0
  %v1027 = vadd.f32 %v864, %v1025
  %v1028 = vadd.f32 %v866, %v1025
  %v1029 = vadd.f32 %v869, %v1025
  %v1030 = vadd.f32 %v871, %v1025
  %v1031 = vadd.f32 %v874, %v1025
  %v1032 = vadd.f32 %v876, %v1025
  %v1033 = vadd.f32 %v879, %v1025
  %v1034 = vadd.f32 %v881, %v1025
  %v1035 = vadd.f32 %v884, %v1025
  %v1036 = vadd.f32 %v886, %v1025
  %v1037 = vadd.f32 %v889, %v1025
  %v1038 = vadd.f32 %v891, %v1025
  %v1039 = vadd.f32 %v894, %v1025
  %v1040 = vadd.f32 %v896, %v1025
  %v1041 = vadd.f32 %v899, %v1025
  %v1042 = vadd.f32 %v901, %v1025
  %v1043 = vadd.f32 %v904, %v1025
  %v1044 = vadd.f32 %v906, %v1025
  %v1045 = vadd.f32 %v909, %v1025
  %v1046 = vadd.f32 %v911, %v1025
  %v1047 = vadd.f32 %v914, %v1025
  %v1048 = vadd.f32 %v916, %v1025
  %v1049 = vadd.f32 %v919, %v1025
  %v1050 = vadd.f32 %v921, %v1025
  %v1051 = vadd.f32 %v924, %v1025
  %v1052 = vadd.f32 %v926, %v1025
  %v1053 = vadd.f32 %v929, %v1025
  %v1054 = vadd.f32 %v931, %v1025
  %v1055 = vadd.f32 %v934, %v1025
  %v1056 = vadd.f32 %v936, %v1025
  %v1057 = vadd.f32 %v939, %v1025
  %v1058 = vadd.f32 %v941, %v1025
  %v1059 = vadd.f32 %v944, %v1025
  %v1060 = vadd.f32 %v946, %v1025
  %v1061 = vadd.f32 %v949, %v1025
  %v1062 = vadd.f32 %v951, %v1025
  %v1063 = vadd.f32 %v954, %v1025
  %v1064 = vadd.f32 %v956, %v1025
  %v1065 = vadd.f32 %v959, %v1025
  %v1066 = vadd.f32 %v961, %v1025
  %v1067 = vadd.f32 %v964, %v1025
  %v1068 = vadd.f32 %v966, %v1025
  %v1069 = vadd.f32 %v969, %v1025
  %v1070 = vadd.f32 %v971, %v1025
  %v1071 = vadd.f32 %v974, %v1025
  %v1072 = vadd.f32 %v976, %v1025
  %v1073 = vadd.f32 %v979, %v1025
  %v1074 = vadd.f32 %v981, %v1025
  %v1075 = vadd.f32 %v984, %v1025
  %v1076 = vadd.f32 %v986, %v1025
  %v1077 = vadd.f32 %v989, %v1025
  %v1078 = vadd.f32 %v991, %v1025
  %v1079 = vadd.f32 %v994, %v1025
  %v1080 = vadd.f32 %v996, %v1025
  %v1081 = vadd.f32 %v999, %v1025
  %v1082 = vadd.f32 %v1001, %v1025
  %v1083 = vadd.f32 %v1004, %v1025
  %v1084 = vadd.f32 %v1006, %v1025
  %v1085 = vadd.f32 %v1009, %v1025
  %v1086 = vadd.f32 %v1011, %v1025
  %v1087 = vadd.f32 %v1014, %v1025
  %v1088 = vadd.f32 %v1016, %v1025
  %v1089 = vadd.f32 %v1019, %v1025
  %v1090 = vadd.f32 %v1021, %v1025
  %v1091 = vmax.f32 %v1027, 0.0
  %v1092 = vmax.f32 %v1028, 0.0
  %v1093 = vmax.f32 %v1029, 0.0
  %v1094 = vmax.f32 %v1030, 0.0
  %v1095 = vmax.f32 %v1031, 0.0
  %v1096 = vmax.f32 %v1032, 0.0
  %v1097 = vmax.f32 %v1033, 0.0
  %v1098 = vmax.f32 %v1034, 0.0
  %v1099 = vmax.f32 %v1035, 0.0
  %v1100 = vmax.f32 %v1036, 0.0
  %v1101 = vmax.f32 %v1037, 0.0
  %v1102 = vmax.f32 %v1038, 0.0
  %v1103 = vmax.f32 %v1039, 0.0
  %v1104 = vmax.f32 %v1040, 0.0
  %v1105 = vmax.f32 %v1041, 0.0
  %v1106 = vmax.f32 %v1042, 0.0
  %v1107 = vmax.f32 %v1043, 0.0
  %v1108 = vmax.f32 %v1044, 0.0
  %v1109 = vmax.f32 %v1045, 0.0
  %v1110 = vmax.f32 %v1046, 0.0
  %v1111 = vmax.f32 %v1047, 0.0
  %v1112 = vmax.f32 %v1048, 0.0
  %v1113 = vmax.f32 %v1049, 0.0
  %v1114 = vmax.f32 %v1050, 0.0
  %v1115 = vmax.f32 %v1051, 0.0
  %v1116 = vmax.f32 %v1052, 0.0
  %v1117 = vmax.f32 %v1053, 0.0
  %v1118 = vmax.f32 %v1054, 0.0
  %v1119 = vmax.f32 %v1055, 0.0
  %v1120 = vmax.f32 %v1056, 0.0
  %v1121 = vmax.f32 %v1057, 0.0
  %v1122 = vmax.f32 %v1058, 0.0
  %v1123 = vmax.f32 %v1059, 0.0
  %v1124 = vmax.f32 %v1060, 0.0
  %v1125 = vmax.f32 %v1061, 0.0
  %v1126 = vmax.f32 %v1062, 0.0
  %v1127 = vmax.f32 %v1063, 0.0
  %v1128 = vmax.f32 %v1064, 0.0
  %v1129 = vmax.f32 %v1065, 0.0
  %v1130 = vmax.f32 %v1066, 0.0
  %v1131 = vmax.f32 %v1067, 0.0
  %v1132 = vmax.f32 %v1068, 0.0
  %v1133 = vmax.f32 %v1069, 0.0
  %v1134 = vmax.f32 %v1070, 0.0
  %v1135 = vmax.f32 %v1071, 0.0
  %v1136 = vmax.f32 %v1072, 0.0
  %v1137 = vmax.f32 %v1073, 0.0
  %v1138 = vmax.f32 %v1074, 0.0
  %v1139 = vmax.f32 %v1075, 0.0
  %v1140 = vmax.f32 %v1076, 0.0
  %v1141 = vmax.f32 %v1077, 0.0
  %v1142 = vmax.f32 %v1078, 0.0
  %v1143 = vmax.f32 %v1079, 0.0
  %v1144 = vmax.f32 %v1080, 0.0
  %v1145 = vmax.f32 %v1081, 0.0
  %v1146 = vmax.f32 %v1082, 0.0
  %v1147 = vmax.f32 %v1083, 0.0
  %v1148 = vmax.f32 %v1084, 0.0
  %v1149 = vmax.f32 %v1085, 0.0
  %v1150 = vmax.f32 %v1086, 0.0
  %v1151 = vmax.f32 %v1087, 0.0
  %v1152 = vmax.f32 %v1088, 0.0
  %v1153 = vmax.f32 %v1089, 0.0
  %v1154 = vmax.f32 %v1090, 0.0
  %v1155 = vld [vmem:[%s5] sm:$0x1]
  %v1157 = vperm.slane %v1155, 0
  %v1159 = vmul.f32 %v1091, %v1157
  %v1160 = vmul.f32 %v1092, %v1157
  %v1161 = vmul.f32 %v1093, %v1157
  %v1162 = vmul.f32 %v1094, %v1157
  %v1163 = vmul.f32 %v1095, %v1157
  %v1164 = vmul.f32 %v1096, %v1157
  %v1165 = vmul.f32 %v1097, %v1157
  %v1166 = vmul.f32 %v1098, %v1157
  %v1167 = vmul.f32 %v1099, %v1157
  %v1168 = vmul.f32 %v1100, %v1157
  %v1169 = vmul.f32 %v1101, %v1157
  %v1170 = vmul.f32 %v1102, %v1157
  %v1171 = vmul.f32 %v1103, %v1157
  %v1172 = vmul.f32 %v1104, %v1157
  %v1173 = vmul.f32 %v1105, %v1157
  %v1174 = vmul.f32 %v1106, %v1157
  %v1175 = vmul.f32 %v1107, %v1157
  %v1176 = vmul.f32 %v1108, %v1157
  %v1177 = vmul.f32 %v1109, %v1157
  %v1178 = vmul.f32 %v1110, %v1157
  %v1179 = vmul.f32 %v1111, %v1157
  %v1180 = vmul.f32 %v1112, %v1157
  %v1181 = vmul.f32 %v1113, %v1157
  %v1182 = vmul.f32 %v1114, %v1157
  %v1183 = vmul.f32 %v1115, %v1157
  %v1184 = vmul.f32 %v1116, %v1157
  %v1185 = vmul.f32 %v1117, %v1157
  %v1186 = vmul.f32 %v1118, %v1157
  %v1187 = vmul.f32 %v1119, %v1157
  %v1188 = vmul.f32 %v1120, %v1157
  %v1189 = vmul.f32 %v1121, %v1157
  %v1190 = vmul.f32 %v1122, %v1157
  %v1191 = vmul.f32 %v1123, %v1157
  %v1192 = vmul.f32 %v1124, %v1157
  %v1193 = vmul.f32 %v1125, %v1157
  %v1194 = vmul.f32 %v1126, %v1157
  %v1195 = vmul.f32 %v1127, %v1157
  %v1196 = vmul.f32 %v1128, %v1157
  %v1197 = vmul.f32 %v1129, %v1157
  %v1198 = vmul.f32 %v1130, %v1157
  %v1199 = vmul.f32 %v1131, %v1157
  %v1200 = vmul.f32 %v1132, %v1157
  %v1201 = vmul.f32 %v1133, %v1157
  %v1202 = vmul.f32 %v1134, %v1157
  %v1203 = vmul.f32 %v1135, %v1157
  %v1204 = vmul.f32 %v1136, %v1157
  %v1205 = vmul.f32 %v1137, %v1157
  %v1206 = vmul.f32 %v1138, %v1157
  %v1207 = vmul.f32 %v1139, %v1157
  %v1208 = vmul.f32 %v1140, %v1157
  %v1209 = vmul.f32 %v1141, %v1157
  %v1210 = vmul.f32 %v1142, %v1157
  %v1211 = vmul.f32 %v1143, %v1157
  %v1212 = vmul.f32 %v1144, %v1157
  %v1213 = vmul.f32 %v1145, %v1157
  %v1214 = vmul.f32 %v1146, %v1157
  %v1215 = vmul.f32 %v1147, %v1157
  %v1216 = vmul.f32 %v1148, %v1157
  %v1217 = vmul.f32 %v1149, %v1157
  %v1218 = vmul.f32 %v1150, %v1157
  %v1219 = vmul.f32 %v1151, %v1157
  %v1220 = vmul.f32 %v1152, %v1157
  %v1221 = vmul.f32 %v1153, %v1157
  %v1222 = vmul.f32 %v1154, %v1157
  %vm1223 = vcmask 261120
  %v1224 = vsel %vm1223, %v1159, 0.0
  %1225 = vadd.xlane.f32.xlu0 %v1224
  %v1226 = vpop.xlane.xlu0 %1225
  %v1227 = vsel %vm1223, %v1160, 0.0
  %1228 = vadd.xlane.f32.xlu0 %v1227
  %v1229 = vpop.xlane.xlu0 %1228
  %v1230 = vsel %vm1223, %v1161, 0.0
  %1231 = vadd.xlane.f32.xlu0 %v1230
  %v1232 = vpop.xlane.xlu0 %1231
  %v1233 = vsel %vm1223, %v1162, 0.0
  %1234 = vadd.xlane.f32.xlu0 %v1233
  %v1235 = vpop.xlane.xlu0 %1234
  %v1236 = vsel %vm1223, %v1163, 0.0
  %1237 = vadd.xlane.f32.xlu0 %v1236
  %v1238 = vpop.xlane.xlu0 %1237
  %v1239 = vsel %vm1223, %v1164, 0.0
  %1240 = vadd.xlane.f32.xlu0 %v1239
  %v1241 = vpop.xlane.xlu0 %1240
  %v1242 = vsel %vm1223, %v1165, 0.0
  %1243 = vadd.xlane.f32.xlu0 %v1242
  %v1244 = vpop.xlane.xlu0 %1243
  %v1245 = vsel %vm1223, %v1166, 0.0
  %1246 = vadd.xlane.f32.xlu0 %v1245
  %v1247 = vpop.xlane.xlu0 %1246
  %v1248 = vsel %vm1223, %v1167, 0.0
  %1249 = vadd.xlane.f32.xlu0 %v1248
  %v1250 = vpop.xlane.xlu0 %1249
  %v1251 = vsel %vm1223, %v1168, 0.0
  %1252 = vadd.xlane.f32.xlu0 %v1251
  %v1253 = vpop.xlane.xlu0 %1252
  %v1254 = vsel %vm1223, %v1169, 0.0
  %1255 = vadd.xlane.f32.xlu0 %v1254
  %v1256 = vpop.xlane.xlu0 %1255
  %v1257 = vsel %vm1223, %v1170, 0.0
  %1258 = vadd.xlane.f32.xlu0 %v1257
  %v1259 = vpop.xlane.xlu0 %1258
  %v1260 = vsel %vm1223, %v1171, 0.0
  %1261 = vadd.xlane.f32.xlu0 %v1260
  %v1262 = vpop.xlane.xlu0 %1261
  %v1263 = vsel %vm1223, %v1172, 0.0
  %1264 = vadd.xlane.f32.xlu0 %v1263
  %v1265 = vpop.xlane.xlu0 %1264
  %v1266 = vsel %vm1223, %v1173, 0.0
  %1267 = vadd.xlane.f32.xlu0 %v1266
  %v1268 = vpop.xlane.xlu0 %1267
  %v1269 = vsel %vm1223, %v1174, 0.0
  %1270 = vadd.xlane.f32.xlu0 %v1269
  %v1271 = vpop.xlane.xlu0 %1270
  %v1272 = vsel %vm1223, %v1175, 0.0
  %1273 = vadd.xlane.f32.xlu0 %v1272
  %v1274 = vpop.xlane.xlu0 %1273
  %v1275 = vsel %vm1223, %v1176, 0.0
  %1276 = vadd.xlane.f32.xlu0 %v1275
  %v1277 = vpop.xlane.xlu0 %1276
  %v1278 = vsel %vm1223, %v1177, 0.0
  %1279 = vadd.xlane.f32.xlu0 %v1278
  %v1280 = vpop.xlane.xlu0 %1279
  %v1281 = vsel %vm1223, %v1178, 0.0
  %1282 = vadd.xlane.f32.xlu0 %v1281
  %v1283 = vpop.xlane.xlu0 %1282
  %v1284 = vsel %vm1223, %v1179, 0.0
  %1285 = vadd.xlane.f32.xlu0 %v1284
  %v1286 = vpop.xlane.xlu0 %1285
  %v1287 = vsel %vm1223, %v1180, 0.0
  %1288 = vadd.xlane.f32.xlu0 %v1287
  %v1289 = vpop.xlane.xlu0 %1288
  %v1290 = vsel %vm1223, %v1181, 0.0
  %1291 = vadd.xlane.f32.xlu0 %v1290
  %v1292 = vpop.xlane.xlu0 %1291
  %v1293 = vsel %vm1223, %v1182, 0.0
  %1294 = vadd.xlane.f32.xlu0 %v1293
  %v1295 = vpop.xlane.xlu0 %1294
  %v1296 = vsel %vm1223, %v1183, 0.0
  %1297 = vadd.xlane.f32.xlu0 %v1296
  %v1298 = vpop.xlane.xlu0 %1297
  %v1299 = vsel %vm1223, %v1184, 0.0
  %1300 = vadd.xlane.f32.xlu0 %v1299
  %v1301 = vpop.xlane.xlu0 %1300
  %v1302 = vsel %vm1223, %v1185, 0.0
  %1303 = vadd.xlane.f32.xlu0 %v1302
  %v1304 = vpop.xlane.xlu0 %1303
  %v1305 = vsel %vm1223, %v1186, 0.0
  %1306 = vadd.xlane.f32.xlu0 %v1305
  %v1307 = vpop.xlane.xlu0 %1306
  %v1308 = vsel %vm1223, %v1187, 0.0
  %1309 = vadd.xlane.f32.xlu0 %v1308
  %v1310 = vpop.xlane.xlu0 %1309
  %v1311 = vsel %vm1223, %v1188, 0.0
  %1312 = vadd.xlane.f32.xlu0 %v1311
  %v1313 = vpop.xlane.xlu0 %1312
  %v1314 = vsel %vm1223, %v1189, 0.0
  %1315 = vadd.xlane.f32.xlu0 %v1314
  %v1316 = vpop.xlane.xlu0 %1315
  %v1317 = vsel %vm1223, %v1190, 0.0
  %1318 = vadd.xlane.f32.xlu0 %v1317
  %v1319 = vpop.xlane.xlu0 %1318
  %v1320 = vsel %vm1223, %v1191, 0.0
  %1321 = vadd.xlane.f32.xlu0 %v1320
  %v1322 = vpop.xlane.xlu0 %1321
  %v1323 = vsel %vm1223, %v1192, 0.0
  %1324 = vadd.xlane.f32.xlu0 %v1323
  %v1325 = vpop.xlane.xlu0 %1324
  %v1326 = vsel %vm1223, %v1193, 0.0
  %1327 = vadd.xlane.f32.xlu0 %v1326
  %v1328 = vpop.xlane.xlu0 %1327
  %v1329 = vsel %vm1223, %v1194, 0.0
  %1330 = vadd.xlane.f32.xlu0 %v1329
  %v1331 = vpop.xlane.xlu0 %1330
  %v1332 = vsel %vm1223, %v1195, 0.0
  %1333 = vadd.xlane.f32.xlu0 %v1332
  %v1334 = vpop.xlane.xlu0 %1333
  %v1335 = vsel %vm1223, %v1196, 0.0
  %1336 = vadd.xlane.f32.xlu0 %v1335
  %v1337 = vpop.xlane.xlu0 %1336
  %v1338 = vsel %vm1223, %v1197, 0.0
  %1339 = vadd.xlane.f32.xlu0 %v1338
  %v1340 = vpop.xlane.xlu0 %1339
  %v1341 = vsel %vm1223, %v1198, 0.0
  %1342 = vadd.xlane.f32.xlu0 %v1341
  %v1343 = vpop.xlane.xlu0 %1342
  %v1344 = vsel %vm1223, %v1199, 0.0
  %1345 = vadd.xlane.f32.xlu0 %v1344
  %v1346 = vpop.xlane.xlu0 %1345
  %v1347 = vsel %vm1223, %v1200, 0.0
  %1348 = vadd.xlane.f32.xlu0 %v1347
  %v1349 = vpop.xlane.xlu0 %1348
  %v1350 = vsel %vm1223, %v1201, 0.0
  %1351 = vadd.xlane.f32.xlu0 %v1350
  %v1352 = vpop.xlane.xlu0 %1351
  %v1353 = vsel %vm1223, %v1202, 0.0
  %1354 = vadd.xlane.f32.xlu0 %v1353
  %v1355 = vpop.xlane.xlu0 %1354
  %v1356 = vsel %vm1223, %v1203, 0.0
  %1357 = vadd.xlane.f32.xlu0 %v1356
  %v1358 = vpop.xlane.xlu0 %1357
  %v1359 = vsel %vm1223, %v1204, 0.0
  %1360 = vadd.xlane.f32.xlu0 %v1359
  %v1361 = vpop.xlane.xlu0 %1360
  %v1362 = vsel %vm1223, %v1205, 0.0
  %1363 = vadd.xlane.f32.xlu0 %v1362
  %v1364 = vpop.xlane.xlu0 %1363
  %v1365 = vsel %vm1223, %v1206, 0.0
  %1366 = vadd.xlane.f32.xlu0 %v1365
  %v1367 = vpop.xlane.xlu0 %1366
  %v1368 = vsel %vm1223, %v1207, 0.0
  %1369 = vadd.xlane.f32.xlu0 %v1368
  %v1370 = vpop.xlane.xlu0 %1369
  %v1371 = vsel %vm1223, %v1208, 0.0
  %1372 = vadd.xlane.f32.xlu0 %v1371
  %v1373 = vpop.xlane.xlu0 %1372
  %v1374 = vsel %vm1223, %v1209, 0.0
  %1375 = vadd.xlane.f32.xlu0 %v1374
  %v1376 = vpop.xlane.xlu0 %1375
  %v1377 = vsel %vm1223, %v1210, 0.0
  %1378 = vadd.xlane.f32.xlu0 %v1377
  %v1379 = vpop.xlane.xlu0 %1378
  %v1380 = vsel %vm1223, %v1211, 0.0
  %1381 = vadd.xlane.f32.xlu0 %v1380
  %v1382 = vpop.xlane.xlu0 %1381
  %v1383 = vsel %vm1223, %v1212, 0.0
  %1384 = vadd.xlane.f32.xlu0 %v1383
  %v1385 = vpop.xlane.xlu0 %1384
  %v1386 = vsel %vm1223, %v1213, 0.0
  %1387 = vadd.xlane.f32.xlu0 %v1386
  %v1388 = vpop.xlane.xlu0 %1387
  %v1389 = vsel %vm1223, %v1214, 0.0
  %1390 = vadd.xlane.f32.xlu0 %v1389
  %v1391 = vpop.xlane.xlu0 %1390
  %v1392 = vsel %vm1223, %v1215, 0.0
  %1393 = vadd.xlane.f32.xlu0 %v1392
  %v1394 = vpop.xlane.xlu0 %1393
  %v1395 = vsel %vm1223, %v1216, 0.0
  %1396 = vadd.xlane.f32.xlu0 %v1395
  %v1397 = vpop.xlane.xlu0 %1396
  %v1398 = vsel %vm1223, %v1217, 0.0
  %1399 = vadd.xlane.f32.xlu0 %v1398
  %v1400 = vpop.xlane.xlu0 %1399
  %v1401 = vsel %vm1223, %v1218, 0.0
  %1402 = vadd.xlane.f32.xlu0 %v1401
  %v1403 = vpop.xlane.xlu0 %1402
  %v1404 = vsel %vm1223, %v1219, 0.0
  %1405 = vadd.xlane.f32.xlu0 %v1404
  %v1406 = vpop.xlane.xlu0 %1405
  %v1407 = vsel %vm1223, %v1220, 0.0
  %1408 = vadd.xlane.f32.xlu0 %v1407
  %v1409 = vpop.xlane.xlu0 %1408
  %v1410 = vsel %vm1223, %v1221, 0.0
  %1411 = vadd.xlane.f32.xlu0 %v1410
  %v1412 = vpop.xlane.xlu0 %1411
  %v1413 = vsel %vm1223, %v1222, 0.0
  %1414 = vadd.xlane.f32.xlu0 %v1413
  %v1415 = vpop.xlane.xlu0 %1414
  %s1416 = sld [smem:[#allocation2]]
  %v1417 = vstv %s1416
  %v1418 = vadd.f32 %v1226, %v1417
  %v1419 = vadd.f32 %v1229, %v1417
  %v1420 = vadd.f32 %v1232, %v1417
  %v1421 = vadd.f32 %v1235, %v1417
  %v1422 = vadd.f32 %v1238, %v1417
  %v1423 = vadd.f32 %v1241, %v1417
  %v1424 = vadd.f32 %v1244, %v1417
  %v1425 = vadd.f32 %v1247, %v1417
  %v1426 = vadd.f32 %v1250, %v1417
  %v1427 = vadd.f32 %v1253, %v1417
  %v1428 = vadd.f32 %v1256, %v1417
  %v1429 = vadd.f32 %v1259, %v1417
  %v1430 = vadd.f32 %v1262, %v1417
  %v1431 = vadd.f32 %v1265, %v1417
  %v1432 = vadd.f32 %v1268, %v1417
  %v1433 = vadd.f32 %v1271, %v1417
  %v1434 = vadd.f32 %v1274, %v1417
  %v1435 = vadd.f32 %v1277, %v1417
  %v1436 = vadd.f32 %v1280, %v1417
  %v1437 = vadd.f32 %v1283, %v1417
  %v1438 = vadd.f32 %v1286, %v1417
  %v1439 = vadd.f32 %v1289, %v1417
  %v1440 = vadd.f32 %v1292, %v1417
  %v1441 = vadd.f32 %v1295, %v1417
  %v1442 = vadd.f32 %v1298, %v1417
  %v1443 = vadd.f32 %v1301, %v1417
  %v1444 = vadd.f32 %v1304, %v1417
  %v1445 = vadd.f32 %v1307, %v1417
  %v1446 = vadd.f32 %v1310, %v1417
  %v1447 = vadd.f32 %v1313, %v1417
  %v1448 = vadd.f32 %v1316, %v1417
  %v1449 = vadd.f32 %v1319, %v1417
  %v1450 = vadd.f32 %v1322, %v1417
  %v1451 = vadd.f32 %v1325, %v1417
  %v1452 = vadd.f32 %v1328, %v1417
  %v1453 = vadd.f32 %v1331, %v1417
  %v1454 = vadd.f32 %v1334, %v1417
  %v1455 = vadd.f32 %v1337, %v1417
  %v1456 = vadd.f32 %v1340, %v1417
  %v1457 = vadd.f32 %v1343, %v1417
  %v1458 = vadd.f32 %v1346, %v1417
  %v1459 = vadd.f32 %v1349, %v1417
  %v1460 = vadd.f32 %v1352, %v1417
  %v1461 = vadd.f32 %v1355, %v1417
  %v1462 = vadd.f32 %v1358, %v1417
  %v1463 = vadd.f32 %v1361, %v1417
  %v1464 = vadd.f32 %v1364, %v1417
  %v1465 = vadd.f32 %v1367, %v1417
  %v1466 = vadd.f32 %v1370, %v1417
  %v1467 = vadd.f32 %v1373, %v1417
  %v1468 = vadd.f32 %v1376, %v1417
  %v1469 = vadd.f32 %v1379, %v1417
  %v1470 = vadd.f32 %v1382, %v1417
  %v1471 = vadd.f32 %v1385, %v1417
  %v1472 = vadd.f32 %v1388, %v1417
  %v1473 = vadd.f32 %v1391, %v1417
  %v1474 = vadd.f32 %v1394, %v1417
  %v1475 = vadd.f32 %v1397, %v1417
  %v1476 = vadd.f32 %v1400, %v1417
  %v1477 = vadd.f32 %v1403, %v1417
  %v1478 = vadd.f32 %v1406, %v1417
  %v1479 = vadd.f32 %v1409, %v1417
  %v1480 = vadd.f32 %v1412, %v1417
  %v1481 = vadd.f32 %v1415, %v1417
  %v1482 = vand.u32 2147483647, %v1418
  %v1483 = vand.u32 2147483647, %v1419
  %v1484 = vand.u32 2147483647, %v1420
  %v1485 = vand.u32 2147483647, %v1421
  %v1486 = vand.u32 2147483647, %v1422
  %v1487 = vand.u32 2147483647, %v1423
  %v1488 = vand.u32 2147483647, %v1424
  %v1489 = vand.u32 2147483647, %v1425
  %v1490 = vand.u32 2147483647, %v1426
  %v1491 = vand.u32 2147483647, %v1427
  %v1492 = vand.u32 2147483647, %v1428
  %v1493 = vand.u32 2147483647, %v1429
  %v1494 = vand.u32 2147483647, %v1430
  %v1495 = vand.u32 2147483647, %v1431
  %v1496 = vand.u32 2147483647, %v1432
  %v1497 = vand.u32 2147483647, %v1433
  %v1498 = vand.u32 2147483647, %v1434
  %v1499 = vand.u32 2147483647, %v1435
  %v1500 = vand.u32 2147483647, %v1436
  %v1501 = vand.u32 2147483647, %v1437
  %v1502 = vand.u32 2147483647, %v1438
  %v1503 = vand.u32 2147483647, %v1439
  %v1504 = vand.u32 2147483647, %v1440
  %v1505 = vand.u32 2147483647, %v1441
  %v1506 = vand.u32 2147483647, %v1442
  %v1507 = vand.u32 2147483647, %v1443
  %v1508 = vand.u32 2147483647, %v1444
  %v1509 = vand.u32 2147483647, %v1445
  %v1510 = vand.u32 2147483647, %v1446
  %v1511 = vand.u32 2147483647, %v1447
  %v1512 = vand.u32 2147483647, %v1448
  %v1513 = vand.u32 2147483647, %v1449
  %v1514 = vand.u32 2147483647, %v1450
  %v1515 = vand.u32 2147483647, %v1451
  %v1516 = vand.u32 2147483647, %v1452
  %v1517 = vand.u32 2147483647, %v1453
  %v1518 = vand.u32 2147483647, %v1454
  %v1519 = vand.u32 2147483647, %v1455
  %v1520 = vand.u32 2147483647, %v1456
  %v1521 = vand.u32 2147483647, %v1457
  %v1522 = vand.u32 2147483647, %v1458
  %v1523 = vand.u32 2147483647, %v1459
  %v1524 = vand.u32 2147483647, %v1460
  %v1525 = vand.u32 2147483647, %v1461
  %v1526 = vand.u32 2147483647, %v1462
  %v1527 = vand.u32 2147483647, %v1463
  %v1528 = vand.u32 2147483647, %v1464
  %v1529 = vand.u32 2147483647, %v1465
  %v1530 = vand.u32 2147483647, %v1466
  %v1531 = vand.u32 2147483647, %v1467
  %v1532 = vand.u32 2147483647, %v1468
  %v1533 = vand.u32 2147483647, %v1469
  %v1534 = vand.u32 2147483647, %v1470
  %v1535 = vand.u32 2147483647, %v1471
  %v1536 = vand.u32 2147483647, %v1472
  %v1537 = vand.u32 2147483647, %v1473
  %v1538 = vand.u32 2147483647, %v1474
  %v1539 = vand.u32 2147483647, %v1475
  %v1540 = vand.u32 2147483647, %v1476
  %v1541 = vand.u32 2147483647, %v1477
  %v1542 = vand.u32 2147483647, %v1478
  %v1543 = vand.u32 2147483647, %v1479
  %v1544 = vand.u32 2147483647, %v1480
  %v1545 = vand.u32 2147483647, %v1481
  %v1546 = vsub.f32 0.0, %v1482
  %v1547 = vsub.f32 0.0, %v1483
  %v1548 = vsub.f32 0.0, %v1484
  %v1549 = vsub.f32 0.0, %v1485
  %v1550 = vsub.f32 0.0, %v1486
  %v1551 = vsub.f32 0.0, %v1487
  %v1552 = vsub.f32 0.0, %v1488
  %v1553 = vsub.f32 0.0, %v1489
  %v1554 = vsub.f32 0.0, %v1490
  %v1555 = vsub.f32 0.0, %v1491
  %v1556 = vsub.f32 0.0, %v1492
  %v1557 = vsub.f32 0.0, %v1493
  %v1558 = vsub.f32 0.0, %v1494
  %v1559 = vsub.f32 0.0, %v1495
  %v1560 = vsub.f32 0.0, %v1496
  %v1561 = vsub.f32 0.0, %v1497
  %v1562 = vsub.f32 0.0, %v1498
  %v1563 = vsub.f32 0.0, %v1499
  %v1564 = vsub.f32 0.0, %v1500
  %v1565 = vsub.f32 0.0, %v1501
  %v1566 = vsub.f32 0.0, %v1502
  %v1567 = vsub.f32 0.0, %v1503
  %v1568 = vsub.f32 0.0, %v1504
  %v1569 = vsub.f32 0.0, %v1505
  %v1570 = vsub.f32 0.0, %v1506
  %v1571 = vsub.f32 0.0, %v1507
  %v1572 = vsub.f32 0.0, %v1508
  %v1573 = vsub.f32 0.0, %v1509
  %v1574 = vsub.f32 0.0, %v1510
  %v1575 = vsub.f32 0.0, %v1511
  %v1576 = vsub.f32 0.0, %v1512
  %v1577 = vsub.f32 0.0, %v1513
  %v1578 = vsub.f32 0.0, %v1514
  %v1579 = vsub.f32 0.0, %v1515
  %v1580 = vsub.f32 0.0, %v1516
  %v1581 = vsub.f32 0.0, %v1517
  %v1582 = vsub.f32 0.0, %v1518
  %v1583 = vsub.f32 0.0, %v1519
  %v1584 = vsub.f32 0.0, %v1520
  %v1585 = vsub.f32 0.0, %v1521
  %v1586 = vsub.f32 0.0, %v1522
  %v1587 = vsub.f32 0.0, %v1523
  %v1588 = vsub.f32 0.0, %v1524
  %v1589 = vsub.f32 0.0, %v1525
  %v1590 = vsub.f32 0.0, %v1526
  %v1591 = vsub.f32 0.0, %v1527
  %v1592 = vsub.f32 0.0, %v1528
  %v1593 = vsub.f32 0.0, %v1529
  %v1594 = vsub.f32 0.0, %v1530
  %v1595 = vsub.f32 0.0, %v1531
  %v1596 = vsub.f32 0.0, %v1532
  %v1597 = vsub.f32 0.0, %v1533
  %v1598 = vsub.f32 0.0, %v1534
  %v1599 = vsub.f32 0.0, %v1535
  %v1600 = vsub.f32 0.0, %v1536
  %v1601 = vsub.f32 0.0, %v1537
  %v1602 = vsub.f32 0.0, %v1538
  %v1603 = vsub.f32 0.0, %v1539
  %v1604 = vsub.f32 0.0, %v1540
  %v1605 = vsub.f32 0.0, %v1541
  %v1606 = vsub.f32 0.0, %v1542
  %v1607 = vsub.f32 0.0, %v1543
  %v1608 = vsub.f32 0.0, %v1544
  %v1609 = vsub.f32 0.0, %v1545
  %v1610 = vmul.f32 %v1546, 1.442695
  %v1611 = vpow.pop %v1610
  %v1612 = vmul.f32 %v1547, 1.442695
  %v1613 = vpow.pop %v1612
  %v1614 = vmul.f32 %v1548, 1.442695
  %v1615 = vpow.pop %v1614
  %v1616 = vmul.f32 %v1549, 1.442695
  %v1617 = vpow.pop %v1616
  %v1618 = vmul.f32 %v1550, 1.442695
  %v1619 = vpow.pop %v1618
  %v1620 = vmul.f32 %v1551, 1.442695
  %v1621 = vpow.pop %v1620
  %v1622 = vmul.f32 %v1552, 1.442695
  %v1623 = vpow.pop %v1622
  %v1624 = vmul.f32 %v1553, 1.442695
  %v1625 = vpow.pop %v1624
  %v1626 = vmul.f32 %v1554, 1.442695
  %v1627 = vpow.pop %v1626
  %v1628 = vmul.f32 %v1555, 1.442695
  %v1629 = vpow.pop %v1628
  %v1630 = vmul.f32 %v1556, 1.442695
  %v1631 = vpow.pop %v1630
  %v1632 = vmul.f32 %v1557, 1.442695
  %v1633 = vpow.pop %v1632
  %v1634 = vmul.f32 %v1558, 1.442695
  %v1635 = vpow.pop %v1634
  %v1636 = vmul.f32 %v1559, 1.442695
  %v1637 = vpow.pop %v1636
  %v1638 = vmul.f32 %v1560, 1.442695
  %v1639 = vpow.pop %v1638
  %v1640 = vmul.f32 %v1561, 1.442695
  %v1641 = vpow.pop %v1640
  %v1642 = vmul.f32 %v1562, 1.442695
  %v1643 = vpow.pop %v1642
  %v1644 = vmul.f32 %v1563, 1.442695
  %v1645 = vpow.pop %v1644
  %v1646 = vmul.f32 %v1564, 1.442695
  %v1647 = vpow.pop %v1646
  %v1648 = vmul.f32 %v1565, 1.442695
  %v1649 = vpow.pop %v1648
  %v1650 = vmul.f32 %v1566, 1.442695
  %v1651 = vpow.pop %v1650
  %v1652 = vmul.f32 %v1567, 1.442695
  %v1653 = vpow.pop %v1652
  %v1654 = vmul.f32 %v1568, 1.442695
  %v1655 = vpow.pop %v1654
  %v1656 = vmul.f32 %v1569, 1.442695
  %v1657 = vpow.pop %v1656
  %v1658 = vmul.f32 %v1570, 1.442695
  %v1659 = vpow.pop %v1658
  %v1660 = vmul.f32 %v1571, 1.442695
  %v1661 = vpow.pop %v1660
  %v1662 = vmul.f32 %v1572, 1.442695
  %v1663 = vpow.pop %v1662
  %v1664 = vmul.f32 %v1573, 1.442695
  %v1665 = vpow.pop %v1664
  %v1666 = vmul.f32 %v1574, 1.442695
  %v1667 = vpow.pop %v1666
  %v1668 = vmul.f32 %v1575, 1.442695
  %v1669 = vpow.pop %v1668
  %v1670 = vmul.f32 %v1576, 1.442695
  %v1671 = vpow.pop %v1670
  %v1672 = vmul.f32 %v1577, 1.442695
  %v1673 = vpow.pop %v1672
  %v1674 = vmul.f32 %v1578, 1.442695
  %v1675 = vpow.pop %v1674
  %v1676 = vmul.f32 %v1579, 1.442695
  %v1677 = vpow.pop %v1676
  %v1678 = vmul.f32 %v1580, 1.442695
  %v1679 = vpow.pop %v1678
  %v1680 = vmul.f32 %v1581, 1.442695
  %v1681 = vpow.pop %v1680
  %v1682 = vmul.f32 %v1582, 1.442695
  %v1683 = vpow.pop %v1682
  %v1684 = vmul.f32 %v1583, 1.442695
  %v1685 = vpow.pop %v1684
  %v1686 = vmul.f32 %v1584, 1.442695
  %v1687 = vpow.pop %v1686
  %v1688 = vmul.f32 %v1585, 1.442695
  %v1689 = vpow.pop %v1688
  %v1690 = vmul.f32 %v1586, 1.442695
  %v1691 = vpow.pop %v1690
  %v1692 = vmul.f32 %v1587, 1.442695
  %v1693 = vpow.pop %v1692
  %v1694 = vmul.f32 %v1588, 1.442695
  %v1695 = vpow.pop %v1694
  %v1696 = vmul.f32 %v1589, 1.442695
  %v1697 = vpow.pop %v1696
  %v1698 = vmul.f32 %v1590, 1.442695
  %v1699 = vpow.pop %v1698
  %v1700 = vmul.f32 %v1591, 1.442695
  %v1701 = vpow.pop %v1700
  %v1702 = vmul.f32 %v1592, 1.442695
  %v1703 = vpow.pop %v1702
  %v1704 = vmul.f32 %v1593, 1.442695
  %v1705 = vpow.pop %v1704
  %v1706 = vmul.f32 %v1594, 1.442695
  %v1707 = vpow.pop %v1706
  %v1708 = vmul.f32 %v1595, 1.442695
  %v1709 = vpow.pop %v1708
  %v1710 = vmul.f32 %v1596, 1.442695
  %v1711 = vpow.pop %v1710
  %v1712 = vmul.f32 %v1597, 1.442695
  %v1713 = vpow.pop %v1712
  %v1714 = vmul.f32 %v1598, 1.442695
  %v1715 = vpow.pop %v1714
  %v1716 = vmul.f32 %v1599, 1.442695
  %v1717 = vpow.pop %v1716
  %v1718 = vmul.f32 %v1600, 1.442695
  %v1719 = vpow.pop %v1718
  %v1720 = vmul.f32 %v1601, 1.442695
  %v1721 = vpow.pop %v1720
  %v1722 = vmul.f32 %v1602, 1.442695
  %v1723 = vpow.pop %v1722
  %v1724 = vmul.f32 %v1603, 1.442695
  %v1725 = vpow.pop %v1724
  %v1726 = vmul.f32 %v1604, 1.442695
  %v1727 = vpow.pop %v1726
  %v1728 = vmul.f32 %v1605, 1.442695
  %v1729 = vpow.pop %v1728
  %v1730 = vmul.f32 %v1606, 1.442695
  %v1731 = vpow.pop %v1730
  %v1732 = vmul.f32 %v1607, 1.442695
  %v1733 = vpow.pop %v1732
  %v1734 = vmul.f32 %v1608, 1.442695
  %v1735 = vpow.pop %v1734
  %v1736 = vmul.f32 %v1609, 1.442695
  %v1737 = vpow.pop %v1736
  %v1738 = vadd.f32 %v1611, 1.0
  %v1739 = vadd.f32 %v1613, 1.0
  %v1740 = vadd.f32 %v1615, 1.0
  %v1741 = vadd.f32 %v1617, 1.0
  %v1742 = vadd.f32 %v1619, 1.0
  %v1743 = vadd.f32 %v1621, 1.0
  %v1744 = vadd.f32 %v1623, 1.0
  %v1745 = vadd.f32 %v1625, 1.0
  %v1746 = vadd.f32 %v1627, 1.0
  %v1747 = vadd.f32 %v1629, 1.0
  %v1748 = vadd.f32 %v1631, 1.0
  %v1749 = vadd.f32 %v1633, 1.0
  %v1750 = vadd.f32 %v1635, 1.0
  %v1751 = vadd.f32 %v1637, 1.0
  %v1752 = vadd.f32 %v1639, 1.0
  %v1753 = vadd.f32 %v1641, 1.0
  %v1754 = vadd.f32 %v1643, 1.0
  %v1755 = vadd.f32 %v1645, 1.0
  %v1756 = vadd.f32 %v1647, 1.0
  %v1757 = vadd.f32 %v1649, 1.0
  %v1758 = vadd.f32 %v1651, 1.0
  %v1759 = vadd.f32 %v1653, 1.0
  %v1760 = vadd.f32 %v1655, 1.0
  %v1761 = vadd.f32 %v1657, 1.0
  %v1762 = vadd.f32 %v1659, 1.0
  %v1763 = vadd.f32 %v1661, 1.0
  %v1764 = vadd.f32 %v1663, 1.0
  %v1765 = vadd.f32 %v1665, 1.0
  %v1766 = vadd.f32 %v1667, 1.0
  %v1767 = vadd.f32 %v1669, 1.0
  %v1768 = vadd.f32 %v1671, 1.0
  %v1769 = vadd.f32 %v1673, 1.0
  %v1770 = vadd.f32 %v1675, 1.0
  %v1771 = vadd.f32 %v1677, 1.0
  %v1772 = vadd.f32 %v1679, 1.0
  %v1773 = vadd.f32 %v1681, 1.0
  %v1774 = vadd.f32 %v1683, 1.0
  %v1775 = vadd.f32 %v1685, 1.0
  %v1776 = vadd.f32 %v1687, 1.0
  %v1777 = vadd.f32 %v1689, 1.0
  %v1778 = vadd.f32 %v1691, 1.0
  %v1779 = vadd.f32 %v1693, 1.0
  %v1780 = vadd.f32 %v1695, 1.0
  %v1781 = vadd.f32 %v1697, 1.0
  %v1782 = vadd.f32 %v1699, 1.0
  %v1783 = vadd.f32 %v1701, 1.0
  %v1784 = vadd.f32 %v1703, 1.0
  %v1785 = vadd.f32 %v1705, 1.0
  %v1786 = vadd.f32 %v1707, 1.0
  %v1787 = vadd.f32 %v1709, 1.0
  %v1788 = vadd.f32 %v1711, 1.0
  %v1789 = vadd.f32 %v1713, 1.0
  %v1790 = vadd.f32 %v1715, 1.0
  %v1791 = vadd.f32 %v1717, 1.0
  %v1792 = vadd.f32 %v1719, 1.0
  %v1793 = vadd.f32 %v1721, 1.0
  %v1794 = vadd.f32 %v1723, 1.0
  %v1795 = vadd.f32 %v1725, 1.0
  %v1796 = vadd.f32 %v1727, 1.0
  %v1797 = vadd.f32 %v1729, 1.0
  %v1798 = vadd.f32 %v1731, 1.0
  %v1799 = vadd.f32 %v1733, 1.0
  %v1800 = vadd.f32 %v1735, 1.0
  %v1801 = vadd.f32 %v1737, 1.0
  %v1802 = vrcp.pop %v1738
  %v1803 = vmul.f32 %v1738, %v1802
  %v1804 = vsub.f32 1.0, %v1803
  %v1805 = vmul.f32 %v1802, %v1804
  %v1806 = vadd.f32 %v1802, %v1805
  %vm1807 = vweird.f32 %v1738
  %vm1808 = vweird.f32 %v1802
  %vm1809 = vmor %vm1807, %vm1808
  %v1810 = vsel %vm1809, %v1802, %v1806
  %v1811 = vand.u32 2147483647, %v1738
  %vm1812 = vcmp.eq.f32.partialorder %v1811, 8.507059e+37
  %v1813 = vand.u32 %v1738, 2147483648
  %v1814 = vor.u32 1.1754944e-38, %v1813
  %v1815 = vsel %vm1812, %v1814, %v1810
  %v1816 = vmul.f32 1.0, %v1815
  %v1817 = vrcp.pop %v1739
  %v1818 = vmul.f32 %v1739, %v1817
  %v1819 = vsub.f32 1.0, %v1818
  %v1820 = vmul.f32 %v1817, %v1819
  %v1821 = vadd.f32 %v1817, %v1820
  %vm1822 = vweird.f32 %v1739
  %vm1823 = vweird.f32 %v1817
  %vm1824 = vmor %vm1822, %vm1823
  %v1825 = vsel %vm1824, %v1817, %v1821
  %v1826 = vand.u32 2147483647, %v1739
  %vm1827 = vcmp.eq.f32.partialorder %v1826, 8.507059e+37
  %v1828 = vand.u32 %v1739, 2147483648
  %v1829 = vor.u32 1.1754944e-38, %v1828
  %v1830 = vsel %vm1827, %v1829, %v1825
  %v1831 = vmul.f32 1.0, %v1830
  %v1832 = vrcp.pop %v1740
  %v1833 = vmul.f32 %v1740, %v1832
  %v1834 = vsub.f32 1.0, %v1833
  %v1835 = vmul.f32 %v1832, %v1834
  %v1836 = vadd.f32 %v1832, %v1835
  %vm1837 = vweird.f32 %v1740
  %vm1838 = vweird.f32 %v1832
  %vm1839 = vmor %vm1837, %vm1838
  %v1840 = vsel %vm1839, %v1832, %v1836
  %v1841 = vand.u32 2147483647, %v1740
  %vm1842 = vcmp.eq.f32.partialorder %v1841, 8.507059e+37
  %v1843 = vand.u32 %v1740, 2147483648
  %v1844 = vor.u32 1.1754944e-38, %v1843
  %v1845 = vsel %vm1842, %v1844, %v1840
  %v1846 = vmul.f32 1.0, %v1845
  %v1847 = vrcp.pop %v1741
  %v1848 = vmul.f32 %v1741, %v1847
  %v1849 = vsub.f32 1.0, %v1848
  %v1850 = vmul.f32 %v1847, %v1849
  %v1851 = vadd.f32 %v1847, %v1850
  %vm1852 = vweird.f32 %v1741
  %vm1853 = vweird.f32 %v1847
  %vm1854 = vmor %vm1852, %vm1853
  %v1855 = vsel %vm1854, %v1847, %v1851
  %v1856 = vand.u32 2147483647, %v1741
  %vm1857 = vcmp.eq.f32.partialorder %v1856, 8.507059e+37
  %v1858 = vand.u32 %v1741, 2147483648
  %v1859 = vor.u32 1.1754944e-38, %v1858
  %v1860 = vsel %vm1857, %v1859, %v1855
  %v1861 = vmul.f32 1.0, %v1860
  %v1862 = vrcp.pop %v1742
  %v1863 = vmul.f32 %v1742, %v1862
  %v1864 = vsub.f32 1.0, %v1863
  %v1865 = vmul.f32 %v1862, %v1864
  %v1866 = vadd.f32 %v1862, %v1865
  %vm1867 = vweird.f32 %v1742
  %vm1868 = vweird.f32 %v1862
  %vm1869 = vmor %vm1867, %vm1868
  %v1870 = vsel %vm1869, %v1862, %v1866
  %v1871 = vand.u32 2147483647, %v1742
  %vm1872 = vcmp.eq.f32.partialorder %v1871, 8.507059e+37
  %v1873 = vand.u32 %v1742, 2147483648
  %v1874 = vor.u32 1.1754944e-38, %v1873
  %v1875 = vsel %vm1872, %v1874, %v1870
  %v1876 = vmul.f32 1.0, %v1875
  %v1877 = vrcp.pop %v1743
  %v1878 = vmul.f32 %v1743, %v1877
  %v1879 = vsub.f32 1.0, %v1878
  %v1880 = vmul.f32 %v1877, %v1879
  %v1881 = vadd.f32 %v1877, %v1880
  %vm1882 = vweird.f32 %v1743
  %vm1883 = vweird.f32 %v1877
  %vm1884 = vmor %vm1882, %vm1883
  %v1885 = vsel %vm1884, %v1877, %v1881
  %v1886 = vand.u32 2147483647, %v1743
  %vm1887 = vcmp.eq.f32.partialorder %v1886, 8.507059e+37
  %v1888 = vand.u32 %v1743, 2147483648
  %v1889 = vor.u32 1.1754944e-38, %v1888
  %v1890 = vsel %vm1887, %v1889, %v1885
  %v1891 = vmul.f32 1.0, %v1890
  %v1892 = vrcp.pop %v1744
  %v1893 = vmul.f32 %v1744, %v1892
  %v1894 = vsub.f32 1.0, %v1893
  %v1895 = vmul.f32 %v1892, %v1894
  %v1896 = vadd.f32 %v1892, %v1895
  %vm1897 = vweird.f32 %v1744
  %vm1898 = vweird.f32 %v1892
  %vm1899 = vmor %vm1897, %vm1898
  %v1900 = vsel %vm1899, %v1892, %v1896
  %v1901 = vand.u32 2147483647, %v1744
  %vm1902 = vcmp.eq.f32.partialorder %v1901, 8.507059e+37
  %v1903 = vand.u32 %v1744, 2147483648
  %v1904 = vor.u32 1.1754944e-38, %v1903
  %v1905 = vsel %vm1902, %v1904, %v1900
  %v1906 = vmul.f32 1.0, %v1905
  %v1907 = vrcp.pop %v1745
  %v1908 = vmul.f32 %v1745, %v1907
  %v1909 = vsub.f32 1.0, %v1908
  %v1910 = vmul.f32 %v1907, %v1909
  %v1911 = vadd.f32 %v1907, %v1910
  %vm1912 = vweird.f32 %v1745
  %vm1913 = vweird.f32 %v1907
  %vm1914 = vmor %vm1912, %vm1913
  %v1915 = vsel %vm1914, %v1907, %v1911
  %v1916 = vand.u32 2147483647, %v1745
  %vm1917 = vcmp.eq.f32.partialorder %v1916, 8.507059e+37
  %v1918 = vand.u32 %v1745, 2147483648
  %v1919 = vor.u32 1.1754944e-38, %v1918
  %v1920 = vsel %vm1917, %v1919, %v1915
  %v1921 = vmul.f32 1.0, %v1920
  %v1922 = vrcp.pop %v1746
  %v1923 = vmul.f32 %v1746, %v1922
  %v1924 = vsub.f32 1.0, %v1923
  %v1925 = vmul.f32 %v1922, %v1924
  %v1926 = vadd.f32 %v1922, %v1925
  %vm1927 = vweird.f32 %v1746
  %vm1928 = vweird.f32 %v1922
  %vm1929 = vmor %vm1927, %vm1928
  %v1930 = vsel %vm1929, %v1922, %v1926
  %v1931 = vand.u32 2147483647, %v1746
  %vm1932 = vcmp.eq.f32.partialorder %v1931, 8.507059e+37
  %v1933 = vand.u32 %v1746, 2147483648
  %v1934 = vor.u32 1.1754944e-38, %v1933
  %v1935 = vsel %vm1932, %v1934, %v1930
  %v1936 = vmul.f32 1.0, %v1935
  %v1937 = vrcp.pop %v1747
  %v1938 = vmul.f32 %v1747, %v1937
  %v1939 = vsub.f32 1.0, %v1938
  %v1940 = vmul.f32 %v1937, %v1939
  %v1941 = vadd.f32 %v1937, %v1940
  %vm1942 = vweird.f32 %v1747
  %vm1943 = vweird.f32 %v1937
  %vm1944 = vmor %vm1942, %vm1943
  %v1945 = vsel %vm1944, %v1937, %v1941
  %v1946 = vand.u32 2147483647, %v1747
  %vm1947 = vcmp.eq.f32.partialorder %v1946, 8.507059e+37
  %v1948 = vand.u32 %v1747, 2147483648
  %v1949 = vor.u32 1.1754944e-38, %v1948
  %v1950 = vsel %vm1947, %v1949, %v1945
  %v1951 = vmul.f32 1.0, %v1950
  %v1952 = vrcp.pop %v1748
  %v1953 = vmul.f32 %v1748, %v1952
  %v1954 = vsub.f32 1.0, %v1953
  %v1955 = vmul.f32 %v1952, %v1954
  %v1956 = vadd.f32 %v1952, %v1955
  %vm1957 = vweird.f32 %v1748
  %vm1958 = vweird.f32 %v1952
  %vm1959 = vmor %vm1957, %vm1958
  %v1960 = vsel %vm1959, %v1952, %v1956
  %v1961 = vand.u32 2147483647, %v1748
  %vm1962 = vcmp.eq.f32.partialorder %v1961, 8.507059e+37
  %v1963 = vand.u32 %v1748, 2147483648
  %v1964 = vor.u32 1.1754944e-38, %v1963
  %v1965 = vsel %vm1962, %v1964, %v1960
  %v1966 = vmul.f32 1.0, %v1965
  %v1967 = vrcp.pop %v1749
  %v1968 = vmul.f32 %v1749, %v1967
  %v1969 = vsub.f32 1.0, %v1968
  %v1970 = vmul.f32 %v1967, %v1969
  %v1971 = vadd.f32 %v1967, %v1970
  %vm1972 = vweird.f32 %v1749
  %vm1973 = vweird.f32 %v1967
  %vm1974 = vmor %vm1972, %vm1973
  %v1975 = vsel %vm1974, %v1967, %v1971
  %v1976 = vand.u32 2147483647, %v1749
  %vm1977 = vcmp.eq.f32.partialorder %v1976, 8.507059e+37
  %v1978 = vand.u32 %v1749, 2147483648
  %v1979 = vor.u32 1.1754944e-38, %v1978
  %v1980 = vsel %vm1977, %v1979, %v1975
  %v1981 = vmul.f32 1.0, %v1980
  %v1982 = vrcp.pop %v1750
  %v1983 = vmul.f32 %v1750, %v1982
  %v1984 = vsub.f32 1.0, %v1983
  %v1985 = vmul.f32 %v1982, %v1984
  %v1986 = vadd.f32 %v1982, %v1985
  %vm1987 = vweird.f32 %v1750
  %vm1988 = vweird.f32 %v1982
  %vm1989 = vmor %vm1987, %vm1988
  %v1990 = vsel %vm1989, %v1982, %v1986
  %v1991 = vand.u32 2147483647, %v1750
  %vm1992 = vcmp.eq.f32.partialorder %v1991, 8.507059e+37
  %v1993 = vand.u32 %v1750, 2147483648
  %v1994 = vor.u32 1.1754944e-38, %v1993
  %v1995 = vsel %vm1992, %v1994, %v1990
  %v1996 = vmul.f32 1.0, %v1995
  %v1997 = vrcp.pop %v1751
  %v1998 = vmul.f32 %v1751, %v1997
  %v1999 = vsub.f32 1.0, %v1998
  %v2000 = vmul.f32 %v1997, %v1999
  %v2001 = vadd.f32 %v1997, %v2000
  %vm2002 = vweird.f32 %v1751
  %vm2003 = vweird.f32 %v1997
  %vm2004 = vmor %vm2002, %vm2003
  %v2005 = vsel %vm2004, %v1997, %v2001
  %v2006 = vand.u32 2147483647, %v1751
  %vm2007 = vcmp.eq.f32.partialorder %v2006, 8.507059e+37
  %v2008 = vand.u32 %v1751, 2147483648
  %v2009 = vor.u32 1.1754944e-38, %v2008
  %v2010 = vsel %vm2007, %v2009, %v2005
  %v2011 = vmul.f32 1.0, %v2010
  %v2012 = vrcp.pop %v1752
  %v2013 = vmul.f32 %v1752, %v2012
  %v2014 = vsub.f32 1.0, %v2013
  %v2015 = vmul.f32 %v2012, %v2014
  %v2016 = vadd.f32 %v2012, %v2015
  %vm2017 = vweird.f32 %v1752
  %vm2018 = vweird.f32 %v2012
  %vm2019 = vmor %vm2017, %vm2018
  %v2020 = vsel %vm2019, %v2012, %v2016
  %v2021 = vand.u32 2147483647, %v1752
  %vm2022 = vcmp.eq.f32.partialorder %v2021, 8.507059e+37
  %v2023 = vand.u32 %v1752, 2147483648
  %v2024 = vor.u32 1.1754944e-38, %v2023
  %v2025 = vsel %vm2022, %v2024, %v2020
  %v2026 = vmul.f32 1.0, %v2025
  %v2027 = vrcp.pop %v1753
  %v2028 = vmul.f32 %v1753, %v2027
  %v2029 = vsub.f32 1.0, %v2028
  %v2030 = vmul.f32 %v2027, %v2029
  %v2031 = vadd.f32 %v2027, %v2030
  %vm2032 = vweird.f32 %v1753
  %vm2033 = vweird.f32 %v2027
  %vm2034 = vmor %vm2032, %vm2033
  %v2035 = vsel %vm2034, %v2027, %v2031
  %v2036 = vand.u32 2147483647, %v1753
  %vm2037 = vcmp.eq.f32.partialorder %v2036, 8.507059e+37
  %v2038 = vand.u32 %v1753, 2147483648
  %v2039 = vor.u32 1.1754944e-38, %v2038
  %v2040 = vsel %vm2037, %v2039, %v2035
  %v2041 = vmul.f32 1.0, %v2040
  %v2042 = vrcp.pop %v1754
  %v2043 = vmul.f32 %v1754, %v2042
  %v2044 = vsub.f32 1.0, %v2043
  %v2045 = vmul.f32 %v2042, %v2044
  %v2046 = vadd.f32 %v2042, %v2045
  %vm2047 = vweird.f32 %v1754
  %vm2048 = vweird.f32 %v2042
  %vm2049 = vmor %vm2047, %vm2048
  %v2050 = vsel %vm2049, %v2042, %v2046
  %v2051 = vand.u32 2147483647, %v1754
  %vm2052 = vcmp.eq.f32.partialorder %v2051, 8.507059e+37
  %v2053 = vand.u32 %v1754, 2147483648
  %v2054 = vor.u32 1.1754944e-38, %v2053
  %v2055 = vsel %vm2052, %v2054, %v2050
  %v2056 = vmul.f32 1.0, %v2055
  %v2057 = vrcp.pop %v1755
  %v2058 = vmul.f32 %v1755, %v2057
  %v2059 = vsub.f32 1.0, %v2058
  %v2060 = vmul.f32 %v2057, %v2059
  %v2061 = vadd.f32 %v2057, %v2060
  %vm2062 = vweird.f32 %v1755
  %vm2063 = vweird.f32 %v2057
  %vm2064 = vmor %vm2062, %vm2063
  %v2065 = vsel %vm2064, %v2057, %v2061
  %v2066 = vand.u32 2147483647, %v1755
  %vm2067 = vcmp.eq.f32.partialorder %v2066, 8.507059e+37
  %v2068 = vand.u32 %v1755, 2147483648
  %v2069 = vor.u32 1.1754944e-38, %v2068
  %v2070 = vsel %vm2067, %v2069, %v2065
  %v2071 = vmul.f32 1.0, %v2070
  %v2072 = vrcp.pop %v1756
  %v2073 = vmul.f32 %v1756, %v2072
  %v2074 = vsub.f32 1.0, %v2073
  %v2075 = vmul.f32 %v2072, %v2074
  %v2076 = vadd.f32 %v2072, %v2075
  %vm2077 = vweird.f32 %v1756
  %vm2078 = vweird.f32 %v2072
  %vm2079 = vmor %vm2077, %vm2078
  %v2080 = vsel %vm2079, %v2072, %v2076
  %v2081 = vand.u32 2147483647, %v1756
  %vm2082 = vcmp.eq.f32.partialorder %v2081, 8.507059e+37
  %v2083 = vand.u32 %v1756, 2147483648
  %v2084 = vor.u32 1.1754944e-38, %v2083
  %v2085 = vsel %vm2082, %v2084, %v2080
  %v2086 = vmul.f32 1.0, %v2085
  %v2087 = vrcp.pop %v1757
  %v2088 = vmul.f32 %v1757, %v2087
  %v2089 = vsub.f32 1.0, %v2088
  %v2090 = vmul.f32 %v2087, %v2089
  %v2091 = vadd.f32 %v2087, %v2090
  %vm2092 = vweird.f32 %v1757
  %vm2093 = vweird.f32 %v2087
  %vm2094 = vmor %vm2092, %vm2093
  %v2095 = vsel %vm2094, %v2087, %v2091
  %v2096 = vand.u32 2147483647, %v1757
  %vm2097 = vcmp.eq.f32.partialorder %v2096, 8.507059e+37
  %v2098 = vand.u32 %v1757, 2147483648
  %v2099 = vor.u32 1.1754944e-38, %v2098
  %v2100 = vsel %vm2097, %v2099, %v2095
  %v2101 = vmul.f32 1.0, %v2100
  %v2102 = vrcp.pop %v1758
  %v2103 = vmul.f32 %v1758, %v2102
  %v2104 = vsub.f32 1.0, %v2103
  %v2105 = vmul.f32 %v2102, %v2104
  %v2106 = vadd.f32 %v2102, %v2105
  %vm2107 = vweird.f32 %v1758
  %vm2108 = vweird.f32 %v2102
  %vm2109 = vmor %vm2107, %vm2108
  %v2110 = vsel %vm2109, %v2102, %v2106
  %v2111 = vand.u32 2147483647, %v1758
  %vm2112 = vcmp.eq.f32.partialorder %v2111, 8.507059e+37
  %v2113 = vand.u32 %v1758, 2147483648
  %v2114 = vor.u32 1.1754944e-38, %v2113
  %v2115 = vsel %vm2112, %v2114, %v2110
  %v2116 = vmul.f32 1.0, %v2115
  %v2117 = vrcp.pop %v1759
  %v2118 = vmul.f32 %v1759, %v2117
  %v2119 = vsub.f32 1.0, %v2118
  %v2120 = vmul.f32 %v2117, %v2119
  %v2121 = vadd.f32 %v2117, %v2120
  %vm2122 = vweird.f32 %v1759
  %vm2123 = vweird.f32 %v2117
  %vm2124 = vmor %vm2122, %vm2123
  %v2125 = vsel %vm2124, %v2117, %v2121
  %v2126 = vand.u32 2147483647, %v1759
  %vm2127 = vcmp.eq.f32.partialorder %v2126, 8.507059e+37
  %v2128 = vand.u32 %v1759, 2147483648
  %v2129 = vor.u32 1.1754944e-38, %v2128
  %v2130 = vsel %vm2127, %v2129, %v2125
  %v2131 = vmul.f32 1.0, %v2130
  %v2132 = vrcp.pop %v1760
  %v2133 = vmul.f32 %v1760, %v2132
  %v2134 = vsub.f32 1.0, %v2133
  %v2135 = vmul.f32 %v2132, %v2134
  %v2136 = vadd.f32 %v2132, %v2135
  %vm2137 = vweird.f32 %v1760
  %vm2138 = vweird.f32 %v2132
  %vm2139 = vmor %vm2137, %vm2138
  %v2140 = vsel %vm2139, %v2132, %v2136
  %v2141 = vand.u32 2147483647, %v1760
  %vm2142 = vcmp.eq.f32.partialorder %v2141, 8.507059e+37
  %v2143 = vand.u32 %v1760, 2147483648
  %v2144 = vor.u32 1.1754944e-38, %v2143
  %v2145 = vsel %vm2142, %v2144, %v2140
  %v2146 = vmul.f32 1.0, %v2145
  %v2147 = vrcp.pop %v1761
  %v2148 = vmul.f32 %v1761, %v2147
  %v2149 = vsub.f32 1.0, %v2148
  %v2150 = vmul.f32 %v2147, %v2149
  %v2151 = vadd.f32 %v2147, %v2150
  %vm2152 = vweird.f32 %v1761
  %vm2153 = vweird.f32 %v2147
  %vm2154 = vmor %vm2152, %vm2153
  %v2155 = vsel %vm2154, %v2147, %v2151
  %v2156 = vand.u32 2147483647, %v1761
  %vm2157 = vcmp.eq.f32.partialorder %v2156, 8.507059e+37
  %v2158 = vand.u32 %v1761, 2147483648
  %v2159 = vor.u32 1.1754944e-38, %v2158
  %v2160 = vsel %vm2157, %v2159, %v2155
  %v2161 = vmul.f32 1.0, %v2160
  %v2162 = vrcp.pop %v1762
  %v2163 = vmul.f32 %v1762, %v2162
  %v2164 = vsub.f32 1.0, %v2163
  %v2165 = vmul.f32 %v2162, %v2164
  %v2166 = vadd.f32 %v2162, %v2165
  %vm2167 = vweird.f32 %v1762
  %vm2168 = vweird.f32 %v2162
  %vm2169 = vmor %vm2167, %vm2168
  %v2170 = vsel %vm2169, %v2162, %v2166
  %v2171 = vand.u32 2147483647, %v1762
  %vm2172 = vcmp.eq.f32.partialorder %v2171, 8.507059e+37
  %v2173 = vand.u32 %v1762, 2147483648
  %v2174 = vor.u32 1.1754944e-38, %v2173
  %v2175 = vsel %vm2172, %v2174, %v2170
  %v2176 = vmul.f32 1.0, %v2175
  %v2177 = vrcp.pop %v1763
  %v2178 = vmul.f32 %v1763, %v2177
  %v2179 = vsub.f32 1.0, %v2178
  %v2180 = vmul.f32 %v2177, %v2179
  %v2181 = vadd.f32 %v2177, %v2180
  %vm2182 = vweird.f32 %v1763
  %vm2183 = vweird.f32 %v2177
  %vm2184 = vmor %vm2182, %vm2183
  %v2185 = vsel %vm2184, %v2177, %v2181
  %v2186 = vand.u32 2147483647, %v1763
  %vm2187 = vcmp.eq.f32.partialorder %v2186, 8.507059e+37
  %v2188 = vand.u32 %v1763, 2147483648
  %v2189 = vor.u32 1.1754944e-38, %v2188
  %v2190 = vsel %vm2187, %v2189, %v2185
  %v2191 = vmul.f32 1.0, %v2190
  %v2192 = vrcp.pop %v1764
  %v2193 = vmul.f32 %v1764, %v2192
  %v2194 = vsub.f32 1.0, %v2193
  %v2195 = vmul.f32 %v2192, %v2194
  %v2196 = vadd.f32 %v2192, %v2195
  %vm2197 = vweird.f32 %v1764
  %vm2198 = vweird.f32 %v2192
  %vm2199 = vmor %vm2197, %vm2198
  %v2200 = vsel %vm2199, %v2192, %v2196
  %v2201 = vand.u32 2147483647, %v1764
  %vm2202 = vcmp.eq.f32.partialorder %v2201, 8.507059e+37
  %v2203 = vand.u32 %v1764, 2147483648
  %v2204 = vor.u32 1.1754944e-38, %v2203
  %v2205 = vsel %vm2202, %v2204, %v2200
  %v2206 = vmul.f32 1.0, %v2205
  %v2207 = vrcp.pop %v1765
  %v2208 = vmul.f32 %v1765, %v2207
  %v2209 = vsub.f32 1.0, %v2208
  %v2210 = vmul.f32 %v2207, %v2209
  %v2211 = vadd.f32 %v2207, %v2210
  %vm2212 = vweird.f32 %v1765
  %vm2213 = vweird.f32 %v2207
  %vm2214 = vmor %vm2212, %vm2213
  %v2215 = vsel %vm2214, %v2207, %v2211
  %v2216 = vand.u32 2147483647, %v1765
  %vm2217 = vcmp.eq.f32.partialorder %v2216, 8.507059e+37
  %v2218 = vand.u32 %v1765, 2147483648
  %v2219 = vor.u32 1.1754944e-38, %v2218
  %v2220 = vsel %vm2217, %v2219, %v2215
  %v2221 = vmul.f32 1.0, %v2220
  %v2222 = vrcp.pop %v1766
  %v2223 = vmul.f32 %v1766, %v2222
  %v2224 = vsub.f32 1.0, %v2223
  %v2225 = vmul.f32 %v2222, %v2224
  %v2226 = vadd.f32 %v2222, %v2225
  %vm2227 = vweird.f32 %v1766
  %vm2228 = vweird.f32 %v2222
  %vm2229 = vmor %vm2227, %vm2228
  %v2230 = vsel %vm2229, %v2222, %v2226
  %v2231 = vand.u32 2147483647, %v1766
  %vm2232 = vcmp.eq.f32.partialorder %v2231, 8.507059e+37
  %v2233 = vand.u32 %v1766, 2147483648
  %v2234 = vor.u32 1.1754944e-38, %v2233
  %v2235 = vsel %vm2232, %v2234, %v2230
  %v2236 = vmul.f32 1.0, %v2235
  %v2237 = vrcp.pop %v1767
  %v2238 = vmul.f32 %v1767, %v2237
  %v2239 = vsub.f32 1.0, %v2238
  %v2240 = vmul.f32 %v2237, %v2239
  %v2241 = vadd.f32 %v2237, %v2240
  %vm2242 = vweird.f32 %v1767
  %vm2243 = vweird.f32 %v2237
  %vm2244 = vmor %vm2242, %vm2243
  %v2245 = vsel %vm2244, %v2237, %v2241
  %v2246 = vand.u32 2147483647, %v1767
  %vm2247 = vcmp.eq.f32.partialorder %v2246, 8.507059e+37
  %v2248 = vand.u32 %v1767, 2147483648
  %v2249 = vor.u32 1.1754944e-38, %v2248
  %v2250 = vsel %vm2247, %v2249, %v2245
  %v2251 = vmul.f32 1.0, %v2250
  %v2252 = vrcp.pop %v1768
  %v2253 = vmul.f32 %v1768, %v2252
  %v2254 = vsub.f32 1.0, %v2253
  %v2255 = vmul.f32 %v2252, %v2254
  %v2256 = vadd.f32 %v2252, %v2255
  %vm2257 = vweird.f32 %v1768
  %vm2258 = vweird.f32 %v2252
  %vm2259 = vmor %vm2257, %vm2258
  %v2260 = vsel %vm2259, %v2252, %v2256
  %v2261 = vand.u32 2147483647, %v1768
  %vm2262 = vcmp.eq.f32.partialorder %v2261, 8.507059e+37
  %v2263 = vand.u32 %v1768, 2147483648
  %v2264 = vor.u32 1.1754944e-38, %v2263
  %v2265 = vsel %vm2262, %v2264, %v2260
  %v2266 = vmul.f32 1.0, %v2265
  %v2267 = vrcp.pop %v1769
  %v2268 = vmul.f32 %v1769, %v2267
  %v2269 = vsub.f32 1.0, %v2268
  %v2270 = vmul.f32 %v2267, %v2269
  %v2271 = vadd.f32 %v2267, %v2270
  %vm2272 = vweird.f32 %v1769
  %vm2273 = vweird.f32 %v2267
  %vm2274 = vmor %vm2272, %vm2273
  %v2275 = vsel %vm2274, %v2267, %v2271
  %v2276 = vand.u32 2147483647, %v1769
  %vm2277 = vcmp.eq.f32.partialorder %v2276, 8.507059e+37
  %v2278 = vand.u32 %v1769, 2147483648
  %v2279 = vor.u32 1.1754944e-38, %v2278
  %v2280 = vsel %vm2277, %v2279, %v2275
  %v2281 = vmul.f32 1.0, %v2280
  %v2282 = vrcp.pop %v1770
  %v2283 = vmul.f32 %v1770, %v2282
  %v2284 = vsub.f32 1.0, %v2283
  %v2285 = vmul.f32 %v2282, %v2284
  %v2286 = vadd.f32 %v2282, %v2285
  %vm2287 = vweird.f32 %v1770
  %vm2288 = vweird.f32 %v2282
  %vm2289 = vmor %vm2287, %vm2288
  %v2290 = vsel %vm2289, %v2282, %v2286
  %v2291 = vand.u32 2147483647, %v1770
  %vm2292 = vcmp.eq.f32.partialorder %v2291, 8.507059e+37
  %v2293 = vand.u32 %v1770, 2147483648
  %v2294 = vor.u32 1.1754944e-38, %v2293
  %v2295 = vsel %vm2292, %v2294, %v2290
  %v2296 = vmul.f32 1.0, %v2295
  %v2297 = vrcp.pop %v1771
  %v2298 = vmul.f32 %v1771, %v2297
  %v2299 = vsub.f32 1.0, %v2298
  %v2300 = vmul.f32 %v2297, %v2299
  %v2301 = vadd.f32 %v2297, %v2300
  %vm2302 = vweird.f32 %v1771
  %vm2303 = vweird.f32 %v2297
  %vm2304 = vmor %vm2302, %vm2303
  %v2305 = vsel %vm2304, %v2297, %v2301
  %v2306 = vand.u32 2147483647, %v1771
  %vm2307 = vcmp.eq.f32.partialorder %v2306, 8.507059e+37
  %v2308 = vand.u32 %v1771, 2147483648
  %v2309 = vor.u32 1.1754944e-38, %v2308
  %v2310 = vsel %vm2307, %v2309, %v2305
  %v2311 = vmul.f32 1.0, %v2310
  %v2312 = vrcp.pop %v1772
  %v2313 = vmul.f32 %v1772, %v2312
  %v2314 = vsub.f32 1.0, %v2313
  %v2315 = vmul.f32 %v2312, %v2314
  %v2316 = vadd.f32 %v2312, %v2315
  %vm2317 = vweird.f32 %v1772
  %vm2318 = vweird.f32 %v2312
  %vm2319 = vmor %vm2317, %vm2318
  %v2320 = vsel %vm2319, %v2312, %v2316
  %v2321 = vand.u32 2147483647, %v1772
  %vm2322 = vcmp.eq.f32.partialorder %v2321, 8.507059e+37
  %v2323 = vand.u32 %v1772, 2147483648
  %v2324 = vor.u32 1.1754944e-38, %v2323
  %v2325 = vsel %vm2322, %v2324, %v2320
  %v2326 = vmul.f32 1.0, %v2325
  %v2327 = vrcp.pop %v1773
  %v2328 = vmul.f32 %v1773, %v2327
  %v2329 = vsub.f32 1.0, %v2328
  %v2330 = vmul.f32 %v2327, %v2329
  %v2331 = vadd.f32 %v2327, %v2330
  %vm2332 = vweird.f32 %v1773
  %vm2333 = vweird.f32 %v2327
  %vm2334 = vmor %vm2332, %vm2333
  %v2335 = vsel %vm2334, %v2327, %v2331
  %v2336 = vand.u32 2147483647, %v1773
  %vm2337 = vcmp.eq.f32.partialorder %v2336, 8.507059e+37
  %v2338 = vand.u32 %v1773, 2147483648
  %v2339 = vor.u32 1.1754944e-38, %v2338
  %v2340 = vsel %vm2337, %v2339, %v2335
  %v2341 = vmul.f32 1.0, %v2340
  %v2342 = vrcp.pop %v1774
  %v2343 = vmul.f32 %v1774, %v2342
  %v2344 = vsub.f32 1.0, %v2343
  %v2345 = vmul.f32 %v2342, %v2344
  %v2346 = vadd.f32 %v2342, %v2345
  %vm2347 = vweird.f32 %v1774
  %vm2348 = vweird.f32 %v2342
  %vm2349 = vmor %vm2347, %vm2348
  %v2350 = vsel %vm2349, %v2342, %v2346
  %v2351 = vand.u32 2147483647, %v1774
  %vm2352 = vcmp.eq.f32.partialorder %v2351, 8.507059e+37
  %v2353 = vand.u32 %v1774, 2147483648
  %v2354 = vor.u32 1.1754944e-38, %v2353
  %v2355 = vsel %vm2352, %v2354, %v2350
  %v2356 = vmul.f32 1.0, %v2355
  %v2357 = vrcp.pop %v1775
  %v2358 = vmul.f32 %v1775, %v2357
  %v2359 = vsub.f32 1.0, %v2358
  %v2360 = vmul.f32 %v2357, %v2359
  %v2361 = vadd.f32 %v2357, %v2360
  %vm2362 = vweird.f32 %v1775
  %vm2363 = vweird.f32 %v2357
  %vm2364 = vmor %vm2362, %vm2363
  %v2365 = vsel %vm2364, %v2357, %v2361
  %v2366 = vand.u32 2147483647, %v1775
  %vm2367 = vcmp.eq.f32.partialorder %v2366, 8.507059e+37
  %v2368 = vand.u32 %v1775, 2147483648
  %v2369 = vor.u32 1.1754944e-38, %v2368
  %v2370 = vsel %vm2367, %v2369, %v2365
  %v2371 = vmul.f32 1.0, %v2370
  %v2372 = vrcp.pop %v1776
  %v2373 = vmul.f32 %v1776, %v2372
  %v2374 = vsub.f32 1.0, %v2373
  %v2375 = vmul.f32 %v2372, %v2374
  %v2376 = vadd.f32 %v2372, %v2375
  %vm2377 = vweird.f32 %v1776
  %vm2378 = vweird.f32 %v2372
  %vm2379 = vmor %vm2377, %vm2378
  %v2380 = vsel %vm2379, %v2372, %v2376
  %v2381 = vand.u32 2147483647, %v1776
  %vm2382 = vcmp.eq.f32.partialorder %v2381, 8.507059e+37
  %v2383 = vand.u32 %v1776, 2147483648
  %v2384 = vor.u32 1.1754944e-38, %v2383
  %v2385 = vsel %vm2382, %v2384, %v2380
  %v2386 = vmul.f32 1.0, %v2385
  %v2387 = vrcp.pop %v1777
  %v2388 = vmul.f32 %v1777, %v2387
  %v2389 = vsub.f32 1.0, %v2388
  %v2390 = vmul.f32 %v2387, %v2389
  %v2391 = vadd.f32 %v2387, %v2390
  %vm2392 = vweird.f32 %v1777
  %vm2393 = vweird.f32 %v2387
  %vm2394 = vmor %vm2392, %vm2393
  %v2395 = vsel %vm2394, %v2387, %v2391
  %v2396 = vand.u32 2147483647, %v1777
  %vm2397 = vcmp.eq.f32.partialorder %v2396, 8.507059e+37
  %v2398 = vand.u32 %v1777, 2147483648
  %v2399 = vor.u32 1.1754944e-38, %v2398
  %v2400 = vsel %vm2397, %v2399, %v2395
  %v2401 = vmul.f32 1.0, %v2400
  %v2402 = vrcp.pop %v1778
  %v2403 = vmul.f32 %v1778, %v2402
  %v2404 = vsub.f32 1.0, %v2403
  %v2405 = vmul.f32 %v2402, %v2404
  %v2406 = vadd.f32 %v2402, %v2405
  %vm2407 = vweird.f32 %v1778
  %vm2408 = vweird.f32 %v2402
  %vm2409 = vmor %vm2407, %vm2408
  %v2410 = vsel %vm2409, %v2402, %v2406
  %v2411 = vand.u32 2147483647, %v1778
  %vm2412 = vcmp.eq.f32.partialorder %v2411, 8.507059e+37
  %v2413 = vand.u32 %v1778, 2147483648
  %v2414 = vor.u32 1.1754944e-38, %v2413
  %v2415 = vsel %vm2412, %v2414, %v2410
  %v2416 = vmul.f32 1.0, %v2415
  %v2417 = vrcp.pop %v1779
  %v2418 = vmul.f32 %v1779, %v2417
  %v2419 = vsub.f32 1.0, %v2418
  %v2420 = vmul.f32 %v2417, %v2419
  %v2421 = vadd.f32 %v2417, %v2420
  %vm2422 = vweird.f32 %v1779
  %vm2423 = vweird.f32 %v2417
  %vm2424 = vmor %vm2422, %vm2423
  %v2425 = vsel %vm2424, %v2417, %v2421
  %v2426 = vand.u32 2147483647, %v1779
  %vm2427 = vcmp.eq.f32.partialorder %v2426, 8.507059e+37
  %v2428 = vand.u32 %v1779, 2147483648
  %v2429 = vor.u32 1.1754944e-38, %v2428
  %v2430 = vsel %vm2427, %v2429, %v2425
  %v2431 = vmul.f32 1.0, %v2430
  %v2432 = vrcp.pop %v1780
  %v2433 = vmul.f32 %v1780, %v2432
  %v2434 = vsub.f32 1.0, %v2433
  %v2435 = vmul.f32 %v2432, %v2434
  %v2436 = vadd.f32 %v2432, %v2435
  %vm2437 = vweird.f32 %v1780
  %vm2438 = vweird.f32 %v2432
  %vm2439 = vmor %vm2437, %vm2438
  %v2440 = vsel %vm2439, %v2432, %v2436
  %v2441 = vand.u32 2147483647, %v1780
  %vm2442 = vcmp.eq.f32.partialorder %v2441, 8.507059e+37
  %v2443 = vand.u32 %v1780, 2147483648
  %v2444 = vor.u32 1.1754944e-38, %v2443
  %v2445 = vsel %vm2442, %v2444, %v2440
  %v2446 = vmul.f32 1.0, %v2445
  %v2447 = vrcp.pop %v1781
  %v2448 = vmul.f32 %v1781, %v2447
  %v2449 = vsub.f32 1.0, %v2448
  %v2450 = vmul.f32 %v2447, %v2449
  %v2451 = vadd.f32 %v2447, %v2450
  %vm2452 = vweird.f32 %v1781
  %vm2453 = vweird.f32 %v2447
  %vm2454 = vmor %vm2452, %vm2453
  %v2455 = vsel %vm2454, %v2447, %v2451
  %v2456 = vand.u32 2147483647, %v1781
  %vm2457 = vcmp.eq.f32.partialorder %v2456, 8.507059e+37
  %v2458 = vand.u32 %v1781, 2147483648
  %v2459 = vor.u32 1.1754944e-38, %v2458
  %v2460 = vsel %vm2457, %v2459, %v2455
  %v2461 = vmul.f32 1.0, %v2460
  %v2462 = vrcp.pop %v1782
  %v2463 = vmul.f32 %v1782, %v2462
  %v2464 = vsub.f32 1.0, %v2463
  %v2465 = vmul.f32 %v2462, %v2464
  %v2466 = vadd.f32 %v2462, %v2465
  %vm2467 = vweird.f32 %v1782
  %vm2468 = vweird.f32 %v2462
  %vm2469 = vmor %vm2467, %vm2468
  %v2470 = vsel %vm2469, %v2462, %v2466
  %v2471 = vand.u32 2147483647, %v1782
  %vm2472 = vcmp.eq.f32.partialorder %v2471, 8.507059e+37
  %v2473 = vand.u32 %v1782, 2147483648
  %v2474 = vor.u32 1.1754944e-38, %v2473
  %v2475 = vsel %vm2472, %v2474, %v2470
  %v2476 = vmul.f32 1.0, %v2475
  %v2477 = vrcp.pop %v1783
  %v2478 = vmul.f32 %v1783, %v2477
  %v2479 = vsub.f32 1.0, %v2478
  %v2480 = vmul.f32 %v2477, %v2479
  %v2481 = vadd.f32 %v2477, %v2480
  %vm2482 = vweird.f32 %v1783
  %vm2483 = vweird.f32 %v2477
  %vm2484 = vmor %vm2482, %vm2483
  %v2485 = vsel %vm2484, %v2477, %v2481
  %v2486 = vand.u32 2147483647, %v1783
  %vm2487 = vcmp.eq.f32.partialorder %v2486, 8.507059e+37
  %v2488 = vand.u32 %v1783, 2147483648
  %v2489 = vor.u32 1.1754944e-38, %v2488
  %v2490 = vsel %vm2487, %v2489, %v2485
  %v2491 = vmul.f32 1.0, %v2490
  %v2492 = vrcp.pop %v1784
  %v2493 = vmul.f32 %v1784, %v2492
  %v2494 = vsub.f32 1.0, %v2493
  %v2495 = vmul.f32 %v2492, %v2494
  %v2496 = vadd.f32 %v2492, %v2495
  %vm2497 = vweird.f32 %v1784
  %vm2498 = vweird.f32 %v2492
  %vm2499 = vmor %vm2497, %vm2498
  %v2500 = vsel %vm2499, %v2492, %v2496
  %v2501 = vand.u32 2147483647, %v1784
  %vm2502 = vcmp.eq.f32.partialorder %v2501, 8.507059e+37
  %v2503 = vand.u32 %v1784, 2147483648
  %v2504 = vor.u32 1.1754944e-38, %v2503
  %v2505 = vsel %vm2502, %v2504, %v2500
  %v2506 = vmul.f32 1.0, %v2505
  %v2507 = vrcp.pop %v1785
  %v2508 = vmul.f32 %v1785, %v2507
  %v2509 = vsub.f32 1.0, %v2508
  %v2510 = vmul.f32 %v2507, %v2509
  %v2511 = vadd.f32 %v2507, %v2510
  %vm2512 = vweird.f32 %v1785
  %vm2513 = vweird.f32 %v2507
  %vm2514 = vmor %vm2512, %vm2513
  %v2515 = vsel %vm2514, %v2507, %v2511
  %v2516 = vand.u32 2147483647, %v1785
  %vm2517 = vcmp.eq.f32.partialorder %v2516, 8.507059e+37
  %v2518 = vand.u32 %v1785, 2147483648
  %v2519 = vor.u32 1.1754944e-38, %v2518
  %v2520 = vsel %vm2517, %v2519, %v2515
  %v2521 = vmul.f32 1.0, %v2520
  %v2522 = vrcp.pop %v1786
  %v2523 = vmul.f32 %v1786, %v2522
  %v2524 = vsub.f32 1.0, %v2523
  %v2525 = vmul.f32 %v2522, %v2524
  %v2526 = vadd.f32 %v2522, %v2525
  %vm2527 = vweird.f32 %v1786
  %vm2528 = vweird.f32 %v2522
  %vm2529 = vmor %vm2527, %vm2528
  %v2530 = vsel %vm2529, %v2522, %v2526
  %v2531 = vand.u32 2147483647, %v1786
  %vm2532 = vcmp.eq.f32.partialorder %v2531, 8.507059e+37
  %v2533 = vand.u32 %v1786, 2147483648
  %v2534 = vor.u32 1.1754944e-38, %v2533
  %v2535 = vsel %vm2532, %v2534, %v2530
  %v2536 = vmul.f32 1.0, %v2535
  %v2537 = vrcp.pop %v1787
  %v2538 = vmul.f32 %v1787, %v2537
  %v2539 = vsub.f32 1.0, %v2538
  %v2540 = vmul.f32 %v2537, %v2539
  %v2541 = vadd.f32 %v2537, %v2540
  %vm2542 = vweird.f32 %v1787
  %vm2543 = vweird.f32 %v2537
  %vm2544 = vmor %vm2542, %vm2543
  %v2545 = vsel %vm2544, %v2537, %v2541
  %v2546 = vand.u32 2147483647, %v1787
  %vm2547 = vcmp.eq.f32.partialorder %v2546, 8.507059e+37
  %v2548 = vand.u32 %v1787, 2147483648
  %v2549 = vor.u32 1.1754944e-38, %v2548
  %v2550 = vsel %vm2547, %v2549, %v2545
  %v2551 = vmul.f32 1.0, %v2550
  %v2552 = vrcp.pop %v1788
  %v2553 = vmul.f32 %v1788, %v2552
  %v2554 = vsub.f32 1.0, %v2553
  %v2555 = vmul.f32 %v2552, %v2554
  %v2556 = vadd.f32 %v2552, %v2555
  %vm2557 = vweird.f32 %v1788
  %vm2558 = vweird.f32 %v2552
  %vm2559 = vmor %vm2557, %vm2558
  %v2560 = vsel %vm2559, %v2552, %v2556
  %v2561 = vand.u32 2147483647, %v1788
  %vm2562 = vcmp.eq.f32.partialorder %v2561, 8.507059e+37
  %v2563 = vand.u32 %v1788, 2147483648
  %v2564 = vor.u32 1.1754944e-38, %v2563
  %v2565 = vsel %vm2562, %v2564, %v2560
  %v2566 = vmul.f32 1.0, %v2565
  %v2567 = vrcp.pop %v1789
  %v2568 = vmul.f32 %v1789, %v2567
  %v2569 = vsub.f32 1.0, %v2568
  %v2570 = vmul.f32 %v2567, %v2569
  %v2571 = vadd.f32 %v2567, %v2570
  %vm2572 = vweird.f32 %v1789
  %vm2573 = vweird.f32 %v2567
  %vm2574 = vmor %vm2572, %vm2573
  %v2575 = vsel %vm2574, %v2567, %v2571
  %v2576 = vand.u32 2147483647, %v1789
  %vm2577 = vcmp.eq.f32.partialorder %v2576, 8.507059e+37
  %v2578 = vand.u32 %v1789, 2147483648
  %v2579 = vor.u32 1.1754944e-38, %v2578
  %v2580 = vsel %vm2577, %v2579, %v2575
  %v2581 = vmul.f32 1.0, %v2580
  %v2582 = vrcp.pop %v1790
  %v2583 = vmul.f32 %v1790, %v2582
  %v2584 = vsub.f32 1.0, %v2583
  %v2585 = vmul.f32 %v2582, %v2584
  %v2586 = vadd.f32 %v2582, %v2585
  %vm2587 = vweird.f32 %v1790
  %vm2588 = vweird.f32 %v2582
  %vm2589 = vmor %vm2587, %vm2588
  %v2590 = vsel %vm2589, %v2582, %v2586
  %v2591 = vand.u32 2147483647, %v1790
  %vm2592 = vcmp.eq.f32.partialorder %v2591, 8.507059e+37
  %v2593 = vand.u32 %v1790, 2147483648
  %v2594 = vor.u32 1.1754944e-38, %v2593
  %v2595 = vsel %vm2592, %v2594, %v2590
  %v2596 = vmul.f32 1.0, %v2595
  %v2597 = vrcp.pop %v1791
  %v2598 = vmul.f32 %v1791, %v2597
  %v2599 = vsub.f32 1.0, %v2598
  %v2600 = vmul.f32 %v2597, %v2599
  %v2601 = vadd.f32 %v2597, %v2600
  %vm2602 = vweird.f32 %v1791
  %vm2603 = vweird.f32 %v2597
  %vm2604 = vmor %vm2602, %vm2603
  %v2605 = vsel %vm2604, %v2597, %v2601
  %v2606 = vand.u32 2147483647, %v1791
  %vm2607 = vcmp.eq.f32.partialorder %v2606, 8.507059e+37
  %v2608 = vand.u32 %v1791, 2147483648
  %v2609 = vor.u32 1.1754944e-38, %v2608
  %v2610 = vsel %vm2607, %v2609, %v2605
  %v2611 = vmul.f32 1.0, %v2610
  %v2612 = vrcp.pop %v1792
  %v2613 = vmul.f32 %v1792, %v2612
  %v2614 = vsub.f32 1.0, %v2613
  %v2615 = vmul.f32 %v2612, %v2614
  %v2616 = vadd.f32 %v2612, %v2615
  %vm2617 = vweird.f32 %v1792
  %vm2618 = vweird.f32 %v2612
  %vm2619 = vmor %vm2617, %vm2618
  %v2620 = vsel %vm2619, %v2612, %v2616
  %v2621 = vand.u32 2147483647, %v1792
  %vm2622 = vcmp.eq.f32.partialorder %v2621, 8.507059e+37
  %v2623 = vand.u32 %v1792, 2147483648
  %v2624 = vor.u32 1.1754944e-38, %v2623
  %v2625 = vsel %vm2622, %v2624, %v2620
  %v2626 = vmul.f32 1.0, %v2625
  %v2627 = vrcp.pop %v1793
  %v2628 = vmul.f32 %v1793, %v2627
  %v2629 = vsub.f32 1.0, %v2628
  %v2630 = vmul.f32 %v2627, %v2629
  %v2631 = vadd.f32 %v2627, %v2630
  %vm2632 = vweird.f32 %v1793
  %vm2633 = vweird.f32 %v2627
  %vm2634 = vmor %vm2632, %vm2633
  %v2635 = vsel %vm2634, %v2627, %v2631
  %v2636 = vand.u32 2147483647, %v1793
  %vm2637 = vcmp.eq.f32.partialorder %v2636, 8.507059e+37
  %v2638 = vand.u32 %v1793, 2147483648
  %v2639 = vor.u32 1.1754944e-38, %v2638
  %v2640 = vsel %vm2637, %v2639, %v2635
  %v2641 = vmul.f32 1.0, %v2640
  %v2642 = vrcp.pop %v1794
  %v2643 = vmul.f32 %v1794, %v2642
  %v2644 = vsub.f32 1.0, %v2643
  %v2645 = vmul.f32 %v2642, %v2644
  %v2646 = vadd.f32 %v2642, %v2645
  %vm2647 = vweird.f32 %v1794
  %vm2648 = vweird.f32 %v2642
  %vm2649 = vmor %vm2647, %vm2648
  %v2650 = vsel %vm2649, %v2642, %v2646
  %v2651 = vand.u32 2147483647, %v1794
  %vm2652 = vcmp.eq.f32.partialorder %v2651, 8.507059e+37
  %v2653 = vand.u32 %v1794, 2147483648
  %v2654 = vor.u32 1.1754944e-38, %v2653
  %v2655 = vsel %vm2652, %v2654, %v2650
  %v2656 = vmul.f32 1.0, %v2655
  %v2657 = vrcp.pop %v1795
  %v2658 = vmul.f32 %v1795, %v2657
  %v2659 = vsub.f32 1.0, %v2658
  %v2660 = vmul.f32 %v2657, %v2659
  %v2661 = vadd.f32 %v2657, %v2660
  %vm2662 = vweird.f32 %v1795
  %vm2663 = vweird.f32 %v2657
  %vm2664 = vmor %vm2662, %vm2663
  %v2665 = vsel %vm2664, %v2657, %v2661
  %v2666 = vand.u32 2147483647, %v1795
  %vm2667 = vcmp.eq.f32.partialorder %v2666, 8.507059e+37
  %v2668 = vand.u32 %v1795, 2147483648
  %v2669 = vor.u32 1.1754944e-38, %v2668
  %v2670 = vsel %vm2667, %v2669, %v2665
  %v2671 = vmul.f32 1.0, %v2670
  %v2672 = vrcp.pop %v1796
  %v2673 = vmul.f32 %v1796, %v2672
  %v2674 = vsub.f32 1.0, %v2673
  %v2675 = vmul.f32 %v2672, %v2674
  %v2676 = vadd.f32 %v2672, %v2675
  %vm2677 = vweird.f32 %v1796
  %vm2678 = vweird.f32 %v2672
  %vm2679 = vmor %vm2677, %vm2678
  %v2680 = vsel %vm2679, %v2672, %v2676
  %v2681 = vand.u32 2147483647, %v1796
  %vm2682 = vcmp.eq.f32.partialorder %v2681, 8.507059e+37
  %v2683 = vand.u32 %v1796, 2147483648
  %v2684 = vor.u32 1.1754944e-38, %v2683
  %v2685 = vsel %vm2682, %v2684, %v2680
  %v2686 = vmul.f32 1.0, %v2685
  %v2687 = vrcp.pop %v1797
  %v2688 = vmul.f32 %v1797, %v2687
  %v2689 = vsub.f32 1.0, %v2688
  %v2690 = vmul.f32 %v2687, %v2689
  %v2691 = vadd.f32 %v2687, %v2690
  %vm2692 = vweird.f32 %v1797
  %vm2693 = vweird.f32 %v2687
  %vm2694 = vmor %vm2692, %vm2693
  %v2695 = vsel %vm2694, %v2687, %v2691
  %v2696 = vand.u32 2147483647, %v1797
  %vm2697 = vcmp.eq.f32.partialorder %v2696, 8.507059e+37
  %v2698 = vand.u32 %v1797, 2147483648
  %v2699 = vor.u32 1.1754944e-38, %v2698
  %v2700 = vsel %vm2697, %v2699, %v2695
  %v2701 = vmul.f32 1.0, %v2700
  %v2702 = vrcp.pop %v1798
  %v2703 = vmul.f32 %v1798, %v2702
  %v2704 = vsub.f32 1.0, %v2703
  %v2705 = vmul.f32 %v2702, %v2704
  %v2706 = vadd.f32 %v2702, %v2705
  %vm2707 = vweird.f32 %v1798
  %vm2708 = vweird.f32 %v2702
  %vm2709 = vmor %vm2707, %vm2708
  %v2710 = vsel %vm2709, %v2702, %v2706
  %v2711 = vand.u32 2147483647, %v1798
  %vm2712 = vcmp.eq.f32.partialorder %v2711, 8.507059e+37
  %v2713 = vand.u32 %v1798, 2147483648
  %v2714 = vor.u32 1.1754944e-38, %v2713
  %v2715 = vsel %vm2712, %v2714, %v2710
  %v2716 = vmul.f32 1.0, %v2715
  %v2717 = vrcp.pop %v1799
  %v2718 = vmul.f32 %v1799, %v2717
  %v2719 = vsub.f32 1.0, %v2718
  %v2720 = vmul.f32 %v2717, %v2719
  %v2721 = vadd.f32 %v2717, %v2720
  %vm2722 = vweird.f32 %v1799
  %vm2723 = vweird.f32 %v2717
  %vm2724 = vmor %vm2722, %vm2723
  %v2725 = vsel %vm2724, %v2717, %v2721
  %v2726 = vand.u32 2147483647, %v1799
  %vm2727 = vcmp.eq.f32.partialorder %v2726, 8.507059e+37
  %v2728 = vand.u32 %v1799, 2147483648
  %v2729 = vor.u32 1.1754944e-38, %v2728
  %v2730 = vsel %vm2727, %v2729, %v2725
  %v2731 = vmul.f32 1.0, %v2730
  %v2732 = vrcp.pop %v1800
  %v2733 = vmul.f32 %v1800, %v2732
  %v2734 = vsub.f32 1.0, %v2733
  %v2735 = vmul.f32 %v2732, %v2734
  %v2736 = vadd.f32 %v2732, %v2735
  %vm2737 = vweird.f32 %v1800
  %vm2738 = vweird.f32 %v2732
  %vm2739 = vmor %vm2737, %vm2738
  %v2740 = vsel %vm2739, %v2732, %v2736
  %v2741 = vand.u32 2147483647, %v1800
  %vm2742 = vcmp.eq.f32.partialorder %v2741, 8.507059e+37
  %v2743 = vand.u32 %v1800, 2147483648
  %v2744 = vor.u32 1.1754944e-38, %v2743
  %v2745 = vsel %vm2742, %v2744, %v2740
  %v2746 = vmul.f32 1.0, %v2745
  %v2747 = vrcp.pop %v1801
  %v2748 = vmul.f32 %v1801, %v2747
  %v2749 = vsub.f32 1.0, %v2748
  %v2750 = vmul.f32 %v2747, %v2749
  %v2751 = vadd.f32 %v2747, %v2750
  %vm2752 = vweird.f32 %v1801
  %vm2753 = vweird.f32 %v2747
  %vm2754 = vmor %vm2752, %vm2753
  %v2755 = vsel %vm2754, %v2747, %v2751
  %v2756 = vand.u32 2147483647, %v1801
  %vm2757 = vcmp.eq.f32.partialorder %v2756, 8.507059e+37
  %v2758 = vand.u32 %v1801, 2147483648
  %v2759 = vor.u32 1.1754944e-38, %v2758
  %v2760 = vsel %vm2757, %v2759, %v2755
  %v2761 = vmul.f32 1.0, %v2760
  %vm2762 = vcmp.ge.f32.partialorder %v1418, 0.0
  %vm2763 = vcmp.ge.f32.partialorder %v1419, 0.0
  %vm2764 = vcmp.ge.f32.partialorder %v1420, 0.0
  %vm2765 = vcmp.ge.f32.partialorder %v1421, 0.0
  %vm2766 = vcmp.ge.f32.partialorder %v1422, 0.0
  %vm2767 = vcmp.ge.f32.partialorder %v1423, 0.0
  %vm2768 = vcmp.ge.f32.partialorder %v1424, 0.0
  %vm2769 = vcmp.ge.f32.partialorder %v1425, 0.0
  %vm2770 = vcmp.ge.f32.partialorder %v1426, 0.0
  %vm2771 = vcmp.ge.f32.partialorder %v1427, 0.0
  %vm2772 = vcmp.ge.f32.partialorder %v1428, 0.0
  %vm2773 = vcmp.ge.f32.partialorder %v1429, 0.0
  %vm2774 = vcmp.ge.f32.partialorder %v1430, 0.0
  %vm2775 = vcmp.ge.f32.partialorder %v1431, 0.0
  %vm2776 = vcmp.ge.f32.partialorder %v1432, 0.0
  %vm2777 = vcmp.ge.f32.partialorder %v1433, 0.0
  %vm2778 = vcmp.ge.f32.partialorder %v1434, 0.0
  %vm2779 = vcmp.ge.f32.partialorder %v1435, 0.0
  %vm2780 = vcmp.ge.f32.partialorder %v1436, 0.0
  %vm2781 = vcmp.ge.f32.partialorder %v1437, 0.0
  %vm2782 = vcmp.ge.f32.partialorder %v1438, 0.0
  %vm2783 = vcmp.ge.f32.partialorder %v1439, 0.0
  %vm2784 = vcmp.ge.f32.partialorder %v1440, 0.0
  %vm2785 = vcmp.ge.f32.partialorder %v1441, 0.0
  %vm2786 = vcmp.ge.f32.partialorder %v1442, 0.0
  %vm2787 = vcmp.ge.f32.partialorder %v1443, 0.0
  %vm2788 = vcmp.ge.f32.partialorder %v1444, 0.0
  %vm2789 = vcmp.ge.f32.partialorder %v1445, 0.0
  %vm2790 = vcmp.ge.f32.partialorder %v1446, 0.0
  %vm2791 = vcmp.ge.f32.partialorder %v1447, 0.0
  %vm2792 = vcmp.ge.f32.partialorder %v1448, 0.0
  %vm2793 = vcmp.ge.f32.partialorder %v1449, 0.0
  %vm2794 = vcmp.ge.f32.partialorder %v1450, 0.0
  %vm2795 = vcmp.ge.f32.partialorder %v1451, 0.0
  %vm2796 = vcmp.ge.f32.partialorder %v1452, 0.0
  %vm2797 = vcmp.ge.f32.partialorder %v1453, 0.0
  %vm2798 = vcmp.ge.f32.partialorder %v1454, 0.0
  %vm2799 = vcmp.ge.f32.partialorder %v1455, 0.0
  %vm2800 = vcmp.ge.f32.partialorder %v1456, 0.0
  %vm2801 = vcmp.ge.f32.partialorder %v1457, 0.0
  %vm2802 = vcmp.ge.f32.partialorder %v1458, 0.0
  %vm2803 = vcmp.ge.f32.partialorder %v1459, 0.0
  %vm2804 = vcmp.ge.f32.partialorder %v1460, 0.0
  %vm2805 = vcmp.ge.f32.partialorder %v1461, 0.0
  %vm2806 = vcmp.ge.f32.partialorder %v1462, 0.0
  %vm2807 = vcmp.ge.f32.partialorder %v1463, 0.0
  %vm2808 = vcmp.ge.f32.partialorder %v1464, 0.0
  %vm2809 = vcmp.ge.f32.partialorder %v1465, 0.0
  %vm2810 = vcmp.ge.f32.partialorder %v1466, 0.0
  %vm2811 = vcmp.ge.f32.partialorder %v1467, 0.0
  %vm2812 = vcmp.ge.f32.partialorder %v1468, 0.0
  %vm2813 = vcmp.ge.f32.partialorder %v1469, 0.0
  %vm2814 = vcmp.ge.f32.partialorder %v1470, 0.0
  %vm2815 = vcmp.ge.f32.partialorder %v1471, 0.0
  %vm2816 = vcmp.ge.f32.partialorder %v1472, 0.0
  %vm2817 = vcmp.ge.f32.partialorder %v1473, 0.0
  %vm2818 = vcmp.ge.f32.partialorder %v1474, 0.0
  %vm2819 = vcmp.ge.f32.partialorder %v1475, 0.0
  %vm2820 = vcmp.ge.f32.partialorder %v1476, 0.0
  %vm2821 = vcmp.ge.f32.partialorder %v1477, 0.0
  %vm2822 = vcmp.ge.f32.partialorder %v1478, 0.0
  %vm2823 = vcmp.ge.f32.partialorder %v1479, 0.0
  %vm2824 = vcmp.ge.f32.partialorder %v1480, 0.0
  %vm2825 = vcmp.ge.f32.partialorder %v1481, 0.0
  %v2826 = vmul.f32 %v1611, %v1816
  %v2827 = vmul.f32 %v1613, %v1831
  %v2828 = vmul.f32 %v1615, %v1846
  %v2829 = vmul.f32 %v1617, %v1861
  %v2830 = vmul.f32 %v1619, %v1876
  %v2831 = vmul.f32 %v1621, %v1891
  %v2832 = vmul.f32 %v1623, %v1906
  %v2833 = vmul.f32 %v1625, %v1921
  %v2834 = vmul.f32 %v1627, %v1936
  %v2835 = vmul.f32 %v1629, %v1951
  %v2836 = vmul.f32 %v1631, %v1966
  %v2837 = vmul.f32 %v1633, %v1981
  %v2838 = vmul.f32 %v1635, %v1996
  %v2839 = vmul.f32 %v1637, %v2011
  %v2840 = vmul.f32 %v1639, %v2026
  %v2841 = vmul.f32 %v1641, %v2041
  %v2842 = vmul.f32 %v1643, %v2056
  %v2843 = vmul.f32 %v1645, %v2071
  %v2844 = vmul.f32 %v1647, %v2086
  %v2845 = vmul.f32 %v1649, %v2101
  %v2846 = vmul.f32 %v1651, %v2116
  %v2847 = vmul.f32 %v1653, %v2131
  %v2848 = vmul.f32 %v1655, %v2146
  %v2849 = vmul.f32 %v1657, %v2161
  %v2850 = vmul.f32 %v1659, %v2176
  %v2851 = vmul.f32 %v1661, %v2191
  %v2852 = vmul.f32 %v1663, %v2206
  %v2853 = vmul.f32 %v1665, %v2221
  %v2854 = vmul.f32 %v1667, %v2236
  %v2855 = vmul.f32 %v1669, %v2251
  %v2856 = vmul.f32 %v1671, %v2266
  %v2857 = vmul.f32 %v1673, %v2281
  %v2858 = vmul.f32 %v1675, %v2296
  %v2859 = vmul.f32 %v1677, %v2311
  %v2860 = vmul.f32 %v1679, %v2326
  %v2861 = vmul.f32 %v1681, %v2341
  %v2862 = vmul.f32 %v1683, %v2356
  %v2863 = vmul.f32 %v1685, %v2371
  %v2864 = vmul.f32 %v1687, %v2386
  %v2865 = vmul.f32 %v1689, %v2401
  %v2866 = vmul.f32 %v1691, %v2416
  %v2867 = vmul.f32 %v1693, %v2431
  %v2868 = vmul.f32 %v1695, %v2446
  %v2869 = vmul.f32 %v1697, %v2461
  %v2870 = vmul.f32 %v1699, %v2476
  %v2871 = vmul.f32 %v1701, %v2491
  %v2872 = vmul.f32 %v1703, %v2506
  %v2873 = vmul.f32 %v1705, %v2521
  %v2874 = vmul.f32 %v1707, %v2536
  %v2875 = vmul.f32 %v1709, %v2551
  %v2876 = vmul.f32 %v1711, %v2566
  %v2877 = vmul.f32 %v1713, %v2581
  %v2878 = vmul.f32 %v1715, %v2596
  %v2879 = vmul.f32 %v1717, %v2611
  %v2880 = vmul.f32 %v1719, %v2626
  %v2881 = vmul.f32 %v1721, %v2641
  %v2882 = vmul.f32 %v1723, %v2656
  %v2883 = vmul.f32 %v1725, %v2671
  %v2884 = vmul.f32 %v1727, %v2686
  %v2885 = vmul.f32 %v1729, %v2701
  %v2886 = vmul.f32 %v1731, %v2716
  %v2887 = vmul.f32 %v1733, %v2731
  %v2888 = vmul.f32 %v1735, %v2746
  %v2889 = vmul.f32 %v1737, %v2761
  %v2890 = vsel %vm2762, %v1816, %v2826
  %v2891 = vsel %vm2763, %v1831, %v2827
  %v2892 = vsel %vm2764, %v1846, %v2828
  %v2893 = vsel %vm2765, %v1861, %v2829
  %v2894 = vsel %vm2766, %v1876, %v2830
  %v2895 = vsel %vm2767, %v1891, %v2831
  %v2896 = vsel %vm2768, %v1906, %v2832
  %v2897 = vsel %vm2769, %v1921, %v2833
  %v2898 = vsel %vm2770, %v1936, %v2834
  %v2899 = vsel %vm2771, %v1951, %v2835
  %v2900 = vsel %vm2772, %v1966, %v2836
  %v2901 = vsel %vm2773, %v1981, %v2837
  %v2902 = vsel %vm2774, %v1996, %v2838
  %v2903 = vsel %vm2775, %v2011, %v2839
  %v2904 = vsel %vm2776, %v2026, %v2840
  %v2905 = vsel %vm2777, %v2041, %v2841
  %v2906 = vsel %vm2778, %v2056, %v2842
  %v2907 = vsel %vm2779, %v2071, %v2843
  %v2908 = vsel %vm2780, %v2086, %v2844
  %v2909 = vsel %vm2781, %v2101, %v2845
  %v2910 = vsel %vm2782, %v2116, %v2846
  %v2911 = vsel %vm2783, %v2131, %v2847
  %v2912 = vsel %vm2784, %v2146, %v2848
  %v2913 = vsel %vm2785, %v2161, %v2849
  %v2914 = vsel %vm2786, %v2176, %v2850
  %v2915 = vsel %vm2787, %v2191, %v2851
  %v2916 = vsel %vm2788, %v2206, %v2852
  %v2917 = vsel %vm2789, %v2221, %v2853
  %v2918 = vsel %vm2790, %v2236, %v2854
  %v2919 = vsel %vm2791, %v2251, %v2855
  %v2920 = vsel %vm2792, %v2266, %v2856
  %v2921 = vsel %vm2793, %v2281, %v2857
  %v2922 = vsel %vm2794, %v2296, %v2858
  %v2923 = vsel %vm2795, %v2311, %v2859
  %v2924 = vsel %vm2796, %v2326, %v2860
  %v2925 = vsel %vm2797, %v2341, %v2861
  %v2926 = vsel %vm2798, %v2356, %v2862
  %v2927 = vsel %vm2799, %v2371, %v2863
  %v2928 = vsel %vm2800, %v2386, %v2864
  %v2929 = vsel %vm2801, %v2401, %v2865
  %v2930 = vsel %vm2802, %v2416, %v2866
  %v2931 = vsel %vm2803, %v2431, %v2867
  %v2932 = vsel %vm2804, %v2446, %v2868
  %v2933 = vsel %vm2805, %v2461, %v2869
  %v2934 = vsel %vm2806, %v2476, %v2870
  %v2935 = vsel %vm2807, %v2491, %v2871
  %v2936 = vsel %vm2808, %v2506, %v2872
  %v2937 = vsel %vm2809, %v2521, %v2873
  %v2938 = vsel %vm2810, %v2536, %v2874
  %v2939 = vsel %vm2811, %v2551, %v2875
  %v2940 = vsel %vm2812, %v2566, %v2876
  %v2941 = vsel %vm2813, %v2581, %v2877
  %v2942 = vsel %vm2814, %v2596, %v2878
  %v2943 = vsel %vm2815, %v2611, %v2879
  %v2944 = vsel %vm2816, %v2626, %v2880
  %v2945 = vsel %vm2817, %v2641, %v2881
  %v2946 = vsel %vm2818, %v2656, %v2882
  %v2947 = vsel %vm2819, %v2671, %v2883
  %v2948 = vsel %vm2820, %v2686, %v2884
  %v2949 = vsel %vm2821, %v2701, %v2885
  %v2950 = vsel %vm2822, %v2716, %v2886
  %v2951 = vsel %vm2823, %v2731, %v2887
  %v2952 = vsel %vm2824, %v2746, %v2888
  %v2953 = vsel %vm2825, %v2761, %v2889
  %vm2954 = vcmask 7168
  %2955 = vst.msk [vmem:[%s7] sm:$0xff] %vm2954, %v2890
  %2956 = vst.msk [vmem:[%s7 + $0x8] sm:$0xff] %vm2954, %v2891
  %2957 = vst.msk [vmem:[%s7 + $0x10] sm:$0xff] %vm2954, %v2892
  %2958 = vst.msk [vmem:[%s7 + $0x18] sm:$0xff] %vm2954, %v2893
  %2959 = vst.msk [vmem:[%s7 + $0x20] sm:$0xff] %vm2954, %v2894
  %2960 = vst.msk [vmem:[%s7 + $0x28] sm:$0xff] %vm2954, %v2895
  %2961 = vst.msk [vmem:[%s7 + $0x30] sm:$0xff] %vm2954, %v2896
  %2962 = vst.msk [vmem:[%s7 + $0x38] sm:$0xff] %vm2954, %v2897
  %2963 = vst.msk [vmem:[%s7 + $0x40] sm:$0xff] %vm2954, %v2898
  %2964 = vst.msk [vmem:[%s7 + $0x48] sm:$0xff] %vm2954, %v2899
  %2965 = vst.msk [vmem:[%s7 + $0x50] sm:$0xff] %vm2954, %v2900
  %2966 = vst.msk [vmem:[%s7 + $0x58] sm:$0xff] %vm2954, %v2901
  %2967 = vst.msk [vmem:[%s7 + $0x60] sm:$0xff] %vm2954, %v2902
  %2968 = vst.msk [vmem:[%s7 + $0x68] sm:$0xff] %vm2954, %v2903
  %2969 = vst.msk [vmem:[%s7 + $0x70] sm:$0xff] %vm2954, %v2904
  %2970 = vst.msk [vmem:[%s7 + $0x78] sm:$0xff] %vm2954, %v2905
  %2971 = vst.msk [vmem:[%s7 + $0x80] sm:$0xff] %vm2954, %v2906
  %2972 = vst.msk [vmem:[%s7 + $0x88] sm:$0xff] %vm2954, %v2907
  %2973 = vst.msk [vmem:[%s7 + $0x90] sm:$0xff] %vm2954, %v2908
  %2974 = vst.msk [vmem:[%s7 + $0x98] sm:$0xff] %vm2954, %v2909
  %2975 = vst.msk [vmem:[%s7 + $0xa0] sm:$0xff] %vm2954, %v2910
  %2976 = vst.msk [vmem:[%s7 + $0xa8] sm:$0xff] %vm2954, %v2911
  %2977 = vst.msk [vmem:[%s7 + $0xb0] sm:$0xff] %vm2954, %v2912
  %2978 = vst.msk [vmem:[%s7 + $0xb8] sm:$0xff] %vm2954, %v2913
  %2979 = vst.msk [vmem:[%s7 + $0xc0] sm:$0xff] %vm2954, %v2914
  %2980 = vst.msk [vmem:[%s7 + $0xc8] sm:$0xff] %vm2954, %v2915
  %2981 = vst.msk [vmem:[%s7 + $0xd0] sm:$0xff] %vm2954, %v2916
  %2982 = vst.msk [vmem:[%s7 + $0xd8] sm:$0xff] %vm2954, %v2917
  %2983 = vst.msk [vmem:[%s7 + $0xe0] sm:$0xff] %vm2954, %v2918
  %2984 = vst.msk [vmem:[%s7 + $0xe8] sm:$0xff] %vm2954, %v2919
  %2985 = vst.msk [vmem:[%s7 + $0xf0] sm:$0xff] %vm2954, %v2920
  %2986 = vst.msk [vmem:[%s7 + $0xf8] sm:$0xff] %vm2954, %v2921
  %2987 = vst.msk [vmem:[%s7 + $0x100] sm:$0xff] %vm2954, %v2922
  %2988 = vst.msk [vmem:[%s7 + $0x108] sm:$0xff] %vm2954, %v2923
  %2989 = vst.msk [vmem:[%s7 + $0x110] sm:$0xff] %vm2954, %v2924
  %2990 = vst.msk [vmem:[%s7 + $0x118] sm:$0xff] %vm2954, %v2925
  %2991 = vst.msk [vmem:[%s7 + $0x120] sm:$0xff] %vm2954, %v2926
  %2992 = vst.msk [vmem:[%s7 + $0x128] sm:$0xff] %vm2954, %v2927
  %2993 = vst.msk [vmem:[%s7 + $0x130] sm:$0xff] %vm2954, %v2928
  %2994 = vst.msk [vmem:[%s7 + $0x138] sm:$0xff] %vm2954, %v2929
  %2995 = vst.msk [vmem:[%s7 + $0x140] sm:$0xff] %vm2954, %v2930
  %2996 = vst.msk [vmem:[%s7 + $0x148] sm:$0xff] %vm2954, %v2931
  %2997 = vst.msk [vmem:[%s7 + $0x150] sm:$0xff] %vm2954, %v2932
  %2998 = vst.msk [vmem:[%s7 + $0x158] sm:$0xff] %vm2954, %v2933
  %2999 = vst.msk [vmem:[%s7 + $0x160] sm:$0xff] %vm2954, %v2934
  %3000 = vst.msk [vmem:[%s7 + $0x168] sm:$0xff] %vm2954, %v2935
  %3001 = vst.msk [vmem:[%s7 + $0x170] sm:$0xff] %vm2954, %v2936
  %3002 = vst.msk [vmem:[%s7 + $0x178] sm:$0xff] %vm2954, %v2937
  %3003 = vst.msk [vmem:[%s7 + $0x180] sm:$0xff] %vm2954, %v2938
  %3004 = vst.msk [vmem:[%s7 + $0x188] sm:$0xff] %vm2954, %v2939
  %3005 = vst.msk [vmem:[%s7 + $0x190] sm:$0xff] %vm2954, %v2940
  %3006 = vst.msk [vmem:[%s7 + $0x198] sm:$0xff] %vm2954, %v2941
  %3007 = vst.msk [vmem:[%s7 + $0x1a0] sm:$0xff] %vm2954, %v2942
  %3008 = vst.msk [vmem:[%s7 + $0x1a8] sm:$0xff] %vm2954, %v2943
  %3009 = vst.msk [vmem:[%s7 + $0x1b0] sm:$0xff] %vm2954, %v2944
  %3010 = vst.msk [vmem:[%s7 + $0x1b8] sm:$0xff] %vm2954, %v2945
  %3011 = vst.msk [vmem:[%s7 + $0x1c0] sm:$0xff] %vm2954, %v2946
  %3012 = vst.msk [vmem:[%s7 + $0x1c8] sm:$0xff] %vm2954, %v2947
  %3013 = vst.msk [vmem:[%s7 + $0x1d0] sm:$0xff] %vm2954, %v2948
  %3014 = vst.msk [vmem:[%s7 + $0x1d8] sm:$0xff] %vm2954, %v2949
  %3015 = vst.msk [vmem:[%s7 + $0x1e0] sm:$0xff] %vm2954, %v2950
  %3016 = vst.msk [vmem:[%s7 + $0x1e8] sm:$0xff] %vm2954, %v2951
  %3017 = vst.msk [vmem:[%s7 + $0x1f0] sm:$0xff] %vm2954, %v2952
  %3018 = vst.msk [vmem:[%s7 + $0x1f8] sm:$0xff] %vm2954, %v2953
  // Predicated region
  $region30: #{tpu_custom_call.1} parent=0 // pred_check
    _
  $region31: #{tpu_custom_call.1} parent=0 // pred_check_branch
    %3020 = sbr.rel (0) target = $region33
  $region32: #{tpu_custom_call.1} parent=0 // pred_region
    _
  $region33: #{tpu_custom_call.1} parent=0 // pred_fallthru
    _
  // Predicated region
  $region34: #{tpu_custom_call.1} parent=0 // pred_check
    _
  $region35: #{tpu_custom_call.1} parent=0 // pred_check_branch
    %3022 = sbr.rel (0) target = $region37
  $region36: #{tpu_custom_call.1} parent=0 // pred_region
    _
  $region37: #{tpu_custom_call.1} parent=0 // pred_fallthru
    _

</llo_original>
